<compile_context>
chip_gen: v5e
topology: v5e:2x2
jax: 0.10.0
libtpu: 0.0.40
codegen_flags: <defaults>
</compile_context>

<pallas_src>
import jax
import jax.numpy as jnp
from jax.experimental import pallas as pl
from jax.experimental.pallas import tpu as pltpu


def _round_up(x, m):
    return ((x + m - 1) // m) * m


# ----------------------------- Pallas kernel --------------------------------

def _fused_point_head_kernel(x_ref, w1_ref, b1_ref, w2_ref, b2_ref,
                             w3_ref, b3_ref, o_ref):
    """[Linear(+folded-BN bias)->ReLU] x2 -> Linear(+bias) for one point tile.

    Both heads live in the same weights (layer-1 concatenated along output
    channels, layers 2/3 block-diagonal, layer-3 zero-padded to 128 output
    lanes), so one 3-matmul chain produces the lane-dense combined output.
    """
    # f32 -> bf16 cast happens here on the VPU: x is read from HBM exactly
    # once (no wrapper-side cast / pad pass).
    x = x_ref[...].astype(w1_ref.dtype)                               # (TN, C_in) bf16
    h = jnp.dot(x, w1_ref[...], preferred_element_type=jnp.float32)   # MXU, f32 acc
    h = jnp.maximum(h + b1_ref[...], 0.0)                             # folded-BN bias + ReLU
    h = jnp.dot(h.astype(w2_ref.dtype), w2_ref[...],
                preferred_element_type=jnp.float32)
    h = jnp.maximum(h + b2_ref[...], 0.0)
    o = jnp.dot(h.astype(w3_ref.dtype), w3_ref[...],
                preferred_element_type=jnp.float32) + b3_ref[...]
    o_ref[...] = o.astype(o_ref.dtype)                                # bf16, 128-lane dense


def fused_point_head_forward(point_features, fused_params, out_channels,
                             *, tn_max=8192):
    """x (N, C_in) -> combined predictions (N, out_channels), one pallas_call.

    `fused_params` must come from `prepare_fused_head_params` (BN folded,
    heads fused, layer-3 padded to 128 lanes, weights already bf16).
    """
    N, C = point_features.shape
    w1, b1, w2, b2, w3, b3 = fused_params
    H1, H2, OUT_PAD = w1.shape[1], w2.shape[1], w3.shape[1]

    # Tile selection: as large as tn_max (big tiles amortize the ~0.35us/step
    # grid overhead; HBM roofline) but never so large that the grid collapses
    # to a single step — with >=2 steps both v7x TensorCores run.  tn_max=8192
    # keeps double-buffered VMEM well inside the 32 MiB scoped default on all
    # generations (v7x has only 64 MiB physical).
    tn = min(tn_max, max(128, _round_up(pl.cdiv(N, 2), 128)))
    grid = pl.cdiv(N, tn)   # ragged last tile handled by Pallas (no jnp.pad)

    cost = pl.CostEstimate(
        flops=int(2 * N * (C * H1 + H1 * H2 + H2 * OUT_PAD)),
        transcendentals=0,
        bytes_accessed=int(
            N * C * point_features.dtype.itemsize          # x read (f32 or bf16)
            + N * OUT_PAD * 2                               # bf16 output write
            + sum(int(p.size) * p.dtype.itemsize for p in fused_params)),
    )

    def resident(arr):
        # small weight / bias blocks: fully resident every grid step
        return pl.BlockSpec(arr.shape, lambda i: (0, 0))

    out = pl.pallas_call(
        _fused_point_head_kernel,
        out_shape=jax.ShapeDtypeStruct((N, OUT_PAD), jnp.bfloat16),
        grid_spec=pltpu.PrefetchScalarGridSpec(
            num_scalar_prefetch=0,
            grid=(grid,),
            in_specs=[
                pl.BlockSpec((tn, C), lambda i: (i, 0)),   # point-feature tile
                resident(w1), resident(b1),
                resident(w2), resident(b2),
                resident(w3), resident(b3),
            ],
            out_specs=pl.BlockSpec((tn, OUT_PAD), lambda i: (i, 0)),
        ),
        compiler_params=pltpu.CompilerParams(
            dimension_semantics=("parallel",)),
        cost_estimate=cost,
    )(point_features, w1, b1, w2, b2, w3, b3)

    # single post-kernel slice (only the lane padding is removed; rows exact)
    return out[:, :out_channels]


# -------------------------- parameter construction --------------------------

def make_fc_layer_params(key, input_channels, fc_cfg, output_channels, eps=1e-5):
    """Synthetic params for make_fc_layers(fc_cfg, C_in, C_out).

    BatchNorm1d (eval mode / frozen running stats) is folded into the
    preceding Linear: W' = W * (gamma / sqrt(var + eps)), plus a per-channel
    bias beta - mean * scale.  Returns (w1, b1, w2, b2, w3, b3) with weights
    stored (C_in, C_out).  NOTE: BN folding is valid only for inference.
    """
    assert len(fc_cfg) == 2  # kernel is written for a 2-hidden-layer head
    keys = jax.random.split(key, 16)
    ki = iter(keys)
    params = []
    c_in = input_channels
    for h in fc_cfg:
        w = jax.random.normal(next(ki), (c_in, h), jnp.float32) * 0.1
        gamma = 1.0 + 0.1 * jax.random.normal(next(ki), (h,), jnp.float32)
        beta = 0.1 * jax.random.normal(next(ki), (h,), jnp.float32)
        mean = 0.05 * jax.random.normal(next(ki), (h,), jnp.float32)
        var = jnp.abs(1.0 + 0.1 * jax.random.normal(next(ki), (h,), jnp.float32))
        scale = gamma / jnp.sqrt(var + eps)
        bias = beta - mean * scale
        params += [w * scale[None, :], bias.reshape(1, h)]    # BN scale folded into W
        c_in = h
    w3 = jax.random.normal(next(ki), (c_in, output_channels), jnp.float32) * 0.1
    b3 = 0.1 * jax.random.normal(next(ki), (output_channels,), jnp.float32)
    params += [w3, b3.reshape(1, output_channels)]
    return tuple(params)


def _block_diag(a, b):
    za = jnp.zeros((a.shape[0], b.shape[1]), a.dtype)
    zb = jnp.zeros((b.shape[0], a.shape[1]), b.dtype)
    return jnp.concatenate(
        [jnp.concatenate([a, za], axis=1),
         jnp.concatenate([zb, b], axis=1)], axis=0)


def prepare_fused_head_params(cls_params, box_params, *, out_pad=128,
                              weight_dtype=jnp.bfloat16):
    """One-time (model-load) fusion of the cls and box heads.

    Layer-1 weights concatenated along output channels, layers 2/3 made
    block-diagonal, layer-3 zero-padded to `out_pad` output lanes so the
    kernel's store is lane-dense, weights cast to bf16 once.  Biases stay f32
    (they are added to the f32 MXU accumulator).
    """
    cw1, cb1, cw2, cb2, cw3, cb3 = cls_params
    bw1, bb1, bw2, bb2, bw3, bb3 = box_params
    w1 = jnp.concatenate([cw1, bw1], axis=1)      # (C_in, H1c + H1b)
    b1 = jnp.concatenate([cb1, bb1], axis=1)
    w2 = _block_diag(cw2, bw2)                    # (H1c+H1b, H2c+H2b)
    b2 = jnp.concatenate([cb2, bb2], axis=1)
    w3 = _block_diag(cw3, bw3)                    # (H2c+H2b, num_class + box_code)
    b3 = jnp.concatenate([cb3, bb3], axis=1)
    out_channels = w3.shape[1]
    pad = out_pad - out_channels
    assert pad >= 0, "out_pad must be >= num_class + box_code_size"
    w3 = jnp.pad(w3, ((0, 0), (0, pad)))          # zero columns -> lane-dense store
    b3 = jnp.pad(b3, ((0, 0), (0, pad)))
    fused = (w1.astype(weight_dtype), b1,
             w2.astype(weight_dtype), b2,
             w3.astype(weight_dtype), b3)
    return fused, out_channels


def ref_mlp_head(x, params, compute_dtype=jnp.bfloat16):
    """Plain-JAX reference with the identical dtype flow (bf16 in, f32 acc)."""
    w1, b1, w2, b2, w3, b3 = params
    cd = compute_dtype
    h = jnp.maximum(jnp.dot(x.astype(cd), w1.astype(cd),
                            preferred_element_type=jnp.float32) + b1, 0.0)
    h = jnp.maximum(jnp.dot(h.astype(cd), w2.astype(cd),
                            preferred_element_type=jnp.float32) + b2, 0.0)
    return jnp.dot(h.astype(cd), w3.astype(cd),
                   preferred_element_type=jnp.float32) + b3


# --------------------------------- driver ------------------------------------

if __name__ == "__main__":
    NUM_CLASS = 3          # Car / Pedestrian / Cyclist
    BOX_CODE_SIZE = 8
    N_POINTS = 1000        # stacked point count (deliberately not a tile multiple)
    C_IN = 32              # per-point feature channels
    FC_CFG = [32, 32]

    key = jax.random.PRNGKey(0)
    k_feat, k_cls, k_box = jax.random.split(key, 3)

    point_features = jax.random.normal(k_feat, (N_POINTS, C_IN), jnp.float32)

    cls_params = make_fc_layer_params(k_cls, C_IN, FC_CFG, NUM_CLASS)
    box_params = make_fc_layer_params(k_box, C_IN, FC_CFG, BOX_CODE_SIZE)
    # One-time model-load prep: BN fold already in make_fc_layer_params; here
    # the heads are fused, lane-padded and bf16-cast once.
    fused_params, out_channels = prepare_fused_head_params(cls_params, box_params)
    assert out_channels == NUM_CLASS + BOX_CODE_SIZE

    # Both heads (the `make_fc_layers` forward hot path) in ONE Pallas call.
    preds = fused_point_head_forward(point_features, fused_params, out_channels)
    preds = jax.block_until_ready(preds)

    point_cls_preds = preds[:, :NUM_CLASS]        # (N, num_class)       bf16
    point_box_preds = preds[:, NUM_CLASS:]        # (N, box_code_size)   bf16

    # generate_predicted_boxes(): argmax over class scores (plain-JAX glue).
    pred_classes = jnp.argmax(point_cls_preds, axis=-1) + 1
    # TODO(synk): box_coder.decode_torch is defined only in subclasses
    # (PointResidualCoder); residual -> box decode is not part of this template.
    # TODO(synk): assign_stack_targets depends on the CUDA op
    # roiaware_pool3d_utils.points_in_boxes_gpu and the loss functions are
    # training-only; neither is translated.

    # correctness check: fused block-diagonal kernel must match running each
    # head separately with the same dtype flow (bf16 in / f32 acc / bf16 out).
    ref_cls = ref_mlp_head(point_features, cls_params).astype(jnp.bfloat16)
    ref_box = ref_mlp_head(point_features, box_params).astype(jnp.bfloat16)
    assert jnp.allclose(point_cls_preds.astype(jnp.float32),
                        ref_cls.astype(jnp.float32), atol=1e-2, rtol=1e-2)
    assert jnp.allclose(point_box_preds.astype(jnp.float32),
                        ref_box.astype(jnp.float32), atol=1e-2, rtol=1e-2)
    assert pred_classes.shape == (N_POINTS,)

    print("KERNEL_OK")
</pallas_src>

<mosaic_0001>
module attributes {stable_mosaic.version = 11 : i64} {
  func.func @_fused_point_head_kernel(%arg0: i32, %arg1: memref<512x32xf32, #tpu.memory_space<vmem>>, %arg2: memref<32x64xbf16, #tpu.memory_space<vmem>>, %arg3: memref<1x64xf32, #tpu.memory_space<vmem>>, %arg4: memref<64x64xbf16, #tpu.memory_space<vmem>>, %arg5: memref<1x64xf32, #tpu.memory_space<vmem>>, %arg6: memref<64x128xbf16, #tpu.memory_space<vmem>>, %arg7: memref<1x128xf32, #tpu.memory_space<vmem>>, %arg8: memref<512x128xbf16, #tpu.memory_space<vmem>>) attributes {dimension_semantics = [#tpu.dimension_semantics<parallel>], iteration_bounds = array<i64: 2>, scalar_prefetch = 0 : i64, scratch_operands = 0 : i64, tpu.core_type = #tpu.core_type<tc>, window_params = [{transform_indices = @transform_0, window_bounds = array<i64: 512, 32>}, {pipeline_mode = #tpu.pipeline_mode<synchronous>, transform_indices = @transform_1, window_bounds = array<i64: 32, 64>}, {pipeline_mode = #tpu.pipeline_mode<synchronous>, transform_indices = @transform_2, window_bounds = array<i64: 1, 64>}, {pipeline_mode = #tpu.pipeline_mode<synchronous>, transform_indices = @transform_3, window_bounds = array<i64: 64, 64>}, {pipeline_mode = #tpu.pipeline_mode<synchronous>, transform_indices = @transform_4, window_bounds = array<i64: 1, 64>}, {pipeline_mode = #tpu.pipeline_mode<synchronous>, transform_indices = @transform_5, window_bounds = array<i64: 64, 128>}, {pipeline_mode = #tpu.pipeline_mode<synchronous>, transform_indices = @transform_6, window_bounds = array<i64: 1, 128>}, {transform_indices = @transform_7, window_bounds = array<i64: 512, 128>}]} {
    %c0 = arith.constant 0 : index
    %c0_0 = arith.constant 0 : index
    %0 = vector.load %arg1[%c0, %c0_0] : memref<512x32xf32, #tpu.memory_space<vmem>>, vector<512x32xf32>
    %1 = arith.truncf %0 : vector<512x32xf32> to vector<512x32xbf16>
    %c0_1 = arith.constant 0 : index
    %c0_2 = arith.constant 0 : index
    %2 = vector.load %arg2[%c0_1, %c0_2] : memref<32x64xbf16, #tpu.memory_space<vmem>>, vector<32x64xbf16>
    %cst = arith.constant dense<0.000000e+00> : vector<512x64xf32>
    %3 = tpu.matmul %1, %2, %cst {dimension_numbers = #tpu.dot_dimension_numbers<[1], [0], [0], [1], [0, 0, 1, 1], [], []>} : vector<512x32xbf16>, vector<32x64xbf16>, vector<512x64xf32> -> vector<512x64xf32>
    %c0_3 = arith.constant 0 : index
    %c0_4 = arith.constant 0 : index
    %4 = vector.load %arg3[%c0_3, %c0_4] : memref<1x64xf32, #tpu.memory_space<vmem>>, vector<1x64xf32>
    %5 = vector.broadcast %4 : vector<1x64xf32> to vector<512x64xf32>
    %6 = arith.addf %3, %5 : vector<512x64xf32>
    %cst_5 = arith.constant 0.000000e+00 : f32
    %7 = vector.broadcast %cst_5 : f32 to vector<512x64xf32>
    %8 = arith.maximumf %6, %7 : vector<512x64xf32>
    %9 = arith.truncf %8 : vector<512x64xf32> to vector<512x64xbf16>
    %c0_6 = arith.constant 0 : index
    %c0_7 = arith.constant 0 : index
    %10 = vector.load %arg4[%c0_6, %c0_7] : memref<64x64xbf16, #tpu.memory_space<vmem>>, vector<64x64xbf16>
    %cst_8 = arith.constant dense<0.000000e+00> : vector<512x64xf32>
    %11 = tpu.matmul %9, %10, %cst_8 {dimension_numbers = #tpu.dot_dimension_numbers<[1], [0], [0], [1], [0, 0, 1, 1], [], []>} : vector<512x64xbf16>, vector<64x64xbf16>, vector<512x64xf32> -> vector<512x64xf32>
    %c0_9 = arith.constant 0 : index
    %c0_10 = arith.constant 0 : index
    %12 = vector.load %arg5[%c0_9, %c0_10] : memref<1x64xf32, #tpu.memory_space<vmem>>, vector<1x64xf32>
    %13 = vector.broadcast %12 : vector<1x64xf32> to vector<512x64xf32>
    %14 = arith.addf %11, %13 : vector<512x64xf32>
    %cst_11 = arith.constant 0.000000e+00 : f32
    %15 = vector.broadcast %cst_11 : f32 to vector<512x64xf32>
    %16 = arith.maximumf %14, %15 : vector<512x64xf32>
    %17 = arith.truncf %16 : vector<512x64xf32> to vector<512x64xbf16>
    %c0_12 = arith.constant 0 : index
    %c0_13 = arith.constant 0 : index
    %18 = vector.load %arg6[%c0_12, %c0_13] : memref<64x128xbf16, #tpu.memory_space<vmem>>, vector<64x128xbf16>
    %cst_14 = arith.constant dense<0.000000e+00> : vector<512x128xf32>
    %19 = tpu.matmul %17, %18, %cst_14 {dimension_numbers = #tpu.dot_dimension_numbers<[1], [0], [0], [1], [0, 0, 1, 1], [], []>} : vector<512x64xbf16>, vector<64x128xbf16>, vector<512x128xf32> -> vector<512x128xf32>
    %c0_15 = arith.constant 0 : index
    %c0_16 = arith.constant 0 : index
    %20 = vector.load %arg7[%c0_15, %c0_16] : memref<1x128xf32, #tpu.memory_space<vmem>>, vector<1x128xf32>
    %21 = vector.broadcast %20 : vector<1x128xf32> to vector<512x128xf32>
    %22 = arith.addf %19, %21 : vector<512x128xf32>
    %23 = arith.truncf %22 : vector<512x128xf32> to vector<512x128xbf16>
    %c0_17 = arith.constant 0 : index
    %c0_18 = arith.constant 0 : index
    %24 = vector.load %arg8[%c0_17, %c0_18] : memref<512x128xbf16, #tpu.memory_space<vmem>>, vector<512x128xbf16>
    tpu.vector_store %arg8[%c0_17, %c0_18], %23 {strides = array<i32>} : memref<512x128xbf16, #tpu.memory_space<vmem>>, vector<512x128xbf16>,
    return
  }
  func.func @transform_0(%arg0: i32) -> (i32, i32) {
    %c0_i32 = arith.constant 0 : i32
    %c0_i32_0 = arith.constant 0 : i32
    return %arg0, %c0_i32 : i32, i32
  }
  func.func @transform_1(%arg0: i32) -> (i32, i32) {
    %c0_i32 = arith.constant 0 : i32
    %c0_i32_0 = arith.constant 0 : i32
    %c0_i32_1 = arith.constant 0 : i32
    return %c0_i32, %c0_i32_0 : i32, i32
  }
  func.func @transform_2(%arg0: i32) -> (i32, i32) {
    %c0_i32 = arith.constant 0 : i32
    %c0_i32_0 = arith.constant 0 : i32
    %c0_i32_1 = arith.constant 0 : i32
    return %c0_i32, %c0_i32_0 : i32, i32
  }
  func.func @transform_3(%arg0: i32) -> (i32, i32) {
    %c0_i32 = arith.constant 0 : i32
    %c0_i32_0 = arith.constant 0 : i32
    %c0_i32_1 = arith.constant 0 : i32
    return %c0_i32, %c0_i32_0 : i32, i32
  }
  func.func @transform_4(%arg0: i32) -> (i32, i32) {
    %c0_i32 = arith.constant 0 : i32
    %c0_i32_0 = arith.constant 0 : i32
    %c0_i32_1 = arith.constant 0 : i32
    return %c0_i32, %c0_i32_0 : i32, i32
  }
  func.func @transform_5(%arg0: i32) -> (i32, i32) {
    %c0_i32 = arith.constant 0 : i32
    %c0_i32_0 = arith.constant 0 : i32
    %c0_i32_1 = arith.constant 0 : i32
    return %c0_i32, %c0_i32_0 : i32, i32
  }
  func.func @transform_6(%arg0: i32) -> (i32, i32) {
    %c0_i32 = arith.constant 0 : i32
    %c0_i32_0 = arith.constant 0 : i32
    %c0_i32_1 = arith.constant 0 : i32
    return %c0_i32, %c0_i32_0 : i32, i32
  }
  func.func @transform_7(%arg0: i32) -> (i32, i32) {
    %c0_i32 = arith.constant 0 : i32
    %c0_i32_0 = arith.constant 0 : i32
    return %arg0, %c0_i32 : i32, i32
  }
}

</mosaic_0001>

<llo_original>
// kernel: tpu_custom_call.1
$region0: #{tpu_custom_call.1}
  #allocation0 [shape = 'u32[]', space=smem, size = 0x4, offset = 0x4, fixed_abs, tag = 'smem constant byte address 0x4 - core index']
  #allocation1 [shape = 'u32[72,128]{1,0:T(1,128)}', space=vmem, size = 0x9000, scoped, tag = 'internal scratch']
  %s0 = inlined_call_operand.vmem [shape: f32[1000,32], index: 0, kind: input, shape index: {}]
  %s1 = inlined_call_operand.vmem [shape: bf16[32,64], index: 1, kind: input, shape index: {}]
  %s2 = inlined_call_operand.vmem [shape: f32[1,64], index: 2, kind: input, shape index: {}]
  %s3 = inlined_call_operand.vmem [shape: bf16[64,64], index: 3, kind: input, shape index: {}]
  %s4 = inlined_call_operand.vmem [shape: f32[1,64], index: 4, kind: input, shape index: {}]
  %s5 = inlined_call_operand.vmem [shape: bf16[64,128], index: 5, kind: input, shape index: {}]
  %s6 = inlined_call_operand.vmem [shape: f32[1,128], index: 6, kind: input, shape index: {}]
  %s7 = inlined_call_operand.hbm [shape: bf16[1000,128], index: 7, kind: output, shape index: {}]
  %s8 = sld [smem:[#allocation0]]
  $region61: #{tpu_custom_call.1} parent=0
    _
  %s10 = ssub.s32 1, %s8
  %s11 = scalar_select 0, %s10, %s8
  $region1: #{tpu_custom_call.1} parent=0
    #allocation2 [shape = 'u8[262144]{0}', space=vmem, size = 0x40000, scoped, tag = 'output window, operand 0']
    #allocation3 [shape = 's32[2]{0}', space=sflag, size = 0x8, scoped, tag = 'scoped memory for tpu_custom_call.1']
    %12 = vsyncpa [#allocation3], 0
    %s13 = scalar_lea.sflag [#allocation3], 1
    %14 = vsyncpa %s13, 0
    loop: start=0, step=1, limit=4
    $region2: #{tpu_custom_call.1} parent=1 // loop_pre_header
      _
    $region3: #{tpu_custom_call.1} parent=1 // loop_header
      %s16 = sphi 0, %s20
      %p17 = scmp.ge.s32.totalorder %s16, 4
      %s26 = sphi 0, %s28
      %s29 = sphi 0, %s26
      %s30 = sphi 0, %s29
      %s46 = sphi 0, %s30
      %s50 = sphi 0, %s50
      %s52 = sphi 0, %s50
      %s53 = sphi 0, %s52
      %s67 = sphi 0, %s53
      %s71 = sphi 0, %s71
      %s73 = sphi 0, %s71
      %s74 = sphi 0, %s73
      %s88 = sphi 0, %s74
      %s92 = sphi 0, %s92
      %s94 = sphi 0, %s92
      %s95 = sphi 0, %s94
      %s109 = sphi 0, %s95
      %s113 = sphi 0, %s113
      %s115 = sphi 0, %s113
      %s116 = sphi 0, %s115
      %s130 = sphi 0, %s116
      %s134 = sphi 0, %s134
      %s136 = sphi 0, %s134
      %s137 = sphi 0, %s136
      %s151 = sphi 0, %s137
      %s155 = sphi 0, %s155
      %s157 = sphi 0, %s155
      %s158 = sphi 0, %s157
      %s172 = sphi 0, %s158
      %s178 = sphi 0, %s180
      %s181 = sphi 0, %s178
      %s182 = sphi 0, %s181
      %s198 = sphi 0, %s182
    $region4: #{tpu_custom_call.1} parent=1 // loop_header_branch
      %19 = sbr.rel (%p17) target = $region8
    $region5: #{tpu_custom_call.1} parent=1 // loop_body
      %s21 = ssub.s32 %s16, 1
      %s22 = ssub.s32 %s16, 2
      %s23 = sadd.s32 %s16, 1
      %s24 = ssub.s32 %s16, %s23
      %p25 = scmp.eq.s32.totalorder %s24, 0
      %s27 = sadd.s32 %s26, 1
      %s28 = scalar_select %p25, %s26, %s27
      %p31 = pneg %p25
      %p32 = scmp.eq.s32.totalorder %s16, 1
      %p33 = por %p31, %p32
      %p34 = scmp.ne.s32.totalorder %s26, %s29
      %p35 = scmp.eq.s32.totalorder %s16, 0
      %p36 = por %p34, %p35
      %p37 = scmp.ne.s32.totalorder %s26, %s29
      %p38 = scmp.eq.s32.totalorder %s21, 1
      %p39 = por %p37, %p38
      %p40 = scmp.ne.s32.totalorder %s29, %s30
      %p41 = scmp.eq.s32.totalorder %s21, 0
      %p42 = por %p40, %p41
      %p43 = scmp.ne.s32.totalorder %s29, %s30
      %p44 = scmp.eq.s32.totalorder %s22, 1
      %p45 = por %p43, %p44
      %p47 = scmp.ne.s32.totalorder %s30, %s46
      %p48 = scmp.eq.s32.totalorder %s22, 0
      %p49 = por %p47, %p48
      %s51 = sadd.s32 %s50, 1
      %p54 = scmp.eq.s32.totalorder %s16, 1
      %p55 = scmp.ne.s32.totalorder %s50, %s52
      %p56 = scmp.eq.s32.totalorder %s16, 0
      %p57 = por %p55, %p56
      %p58 = scmp.ne.s32.totalorder %s50, %s52
      %p59 = scmp.eq.s32.totalorder %s21, 1
      %p60 = por %p58, %p59
      %p61 = scmp.ne.s32.totalorder %s52, %s53
      %p62 = scmp.eq.s32.totalorder %s21, 0
      %p63 = por %p61, %p62
      %p64 = scmp.ne.s32.totalorder %s52, %s53
      %p65 = scmp.eq.s32.totalorder %s22, 1
      %p66 = por %p64, %p65
      %p68 = scmp.ne.s32.totalorder %s53, %s67
      %p69 = scmp.eq.s32.totalorder %s22, 0
      %p70 = por %p68, %p69
      %s72 = sadd.s32 %s71, 1
      %p75 = scmp.eq.s32.totalorder %s16, 1
      %p76 = scmp.ne.s32.totalorder %s71, %s73
      %p77 = scmp.eq.s32.totalorder %s16, 0
      %p78 = por %p76, %p77
      %p79 = scmp.ne.s32.totalorder %s71, %s73
      %p80 = scmp.eq.s32.totalorder %s21, 1
      %p81 = por %p79, %p80
      %p82 = scmp.ne.s32.totalorder %s73, %s74
      %p83 = scmp.eq.s32.totalorder %s21, 0
      %p84 = por %p82, %p83
      %p85 = scmp.ne.s32.totalorder %s73, %s74
      %p86 = scmp.eq.s32.totalorder %s22, 1
      %p87 = por %p85, %p86
      %p89 = scmp.ne.s32.totalorder %s74, %s88
      %p90 = scmp.eq.s32.totalorder %s22, 0
      %p91 = por %p89, %p90
      %s93 = sadd.s32 %s92, 1
      %p96 = scmp.eq.s32.totalorder %s16, 1
      %p97 = scmp.ne.s32.totalorder %s92, %s94
      %p98 = scmp.eq.s32.totalorder %s16, 0
      %p99 = por %p97, %p98
      %p100 = scmp.ne.s32.totalorder %s92, %s94
      %p101 = scmp.eq.s32.totalorder %s21, 1
      %p102 = por %p100, %p101
      %p103 = scmp.ne.s32.totalorder %s94, %s95
      %p104 = scmp.eq.s32.totalorder %s21, 0
      %p105 = por %p103, %p104
      %p106 = scmp.ne.s32.totalorder %s94, %s95
      %p107 = scmp.eq.s32.totalorder %s22, 1
      %p108 = por %p106, %p107
      %p110 = scmp.ne.s32.totalorder %s95, %s109
      %p111 = scmp.eq.s32.totalorder %s22, 0
      %p112 = por %p110, %p111
      %s114 = sadd.s32 %s113, 1
      %p117 = scmp.eq.s32.totalorder %s16, 1
      %p118 = scmp.ne.s32.totalorder %s113, %s115
      %p119 = scmp.eq.s32.totalorder %s16, 0
      %p120 = por %p118, %p119
      %p121 = scmp.ne.s32.totalorder %s113, %s115
      %p122 = scmp.eq.s32.totalorder %s21, 1
      %p123 = por %p121, %p122
      %p124 = scmp.ne.s32.totalorder %s115, %s116
      %p125 = scmp.eq.s32.totalorder %s21, 0
      %p126 = por %p124, %p125
      %p127 = scmp.ne.s32.totalorder %s115, %s116
      %p128 = scmp.eq.s32.totalorder %s22, 1
      %p129 = por %p127, %p128
      %p131 = scmp.ne.s32.totalorder %s116, %s130
      %p132 = scmp.eq.s32.totalorder %s22, 0
      %p133 = por %p131, %p132
      %s135 = sadd.s32 %s134, 1
      %p138 = scmp.eq.s32.totalorder %s16, 1
      %p139 = scmp.ne.s32.totalorder %s134, %s136
      %p140 = scmp.eq.s32.totalorder %s16, 0
      %p141 = por %p139, %p140
      %p142 = scmp.ne.s32.totalorder %s134, %s136
      %p143 = scmp.eq.s32.totalorder %s21, 1
      %p144 = por %p142, %p143
      %p145 = scmp.ne.s32.totalorder %s136, %s137
      %p146 = scmp.eq.s32.totalorder %s21, 0
      %p147 = por %p145, %p146
      %p148 = scmp.ne.s32.totalorder %s136, %s137
      %p149 = scmp.eq.s32.totalorder %s22, 1
      %p150 = por %p148, %p149
      %p152 = scmp.ne.s32.totalorder %s137, %s151
      %p153 = scmp.eq.s32.totalorder %s22, 0
      %p154 = por %p152, %p153
      %s156 = sadd.s32 %s155, 1
      %p159 = scmp.eq.s32.totalorder %s16, 1
      %p160 = scmp.ne.s32.totalorder %s155, %s157
      %p161 = scmp.eq.s32.totalorder %s16, 0
      %p162 = por %p160, %p161
      %p163 = scmp.ne.s32.totalorder %s155, %s157
      %p164 = scmp.eq.s32.totalorder %s21, 1
      %p165 = por %p163, %p164
      %p166 = scmp.ne.s32.totalorder %s157, %s158
      %p167 = scmp.eq.s32.totalorder %s21, 0
      %p168 = por %p166, %p167
      %p169 = scmp.ne.s32.totalorder %s157, %s158
      %p170 = scmp.eq.s32.totalorder %s22, 1
      %p171 = por %p169, %p170
      %p173 = scmp.ne.s32.totalorder %s158, %s172
      %p174 = scmp.eq.s32.totalorder %s22, 0
      %p175 = por %p173, %p174
      %s176 = ssub.s32 %s16, %s23
      %p177 = scmp.eq.s32.totalorder %s176, 0
      %s179 = sadd.s32 %s178, 1
      %s180 = scalar_select %p177, %s178, %s179
      %p183 = pneg %p177
      %p184 = scmp.eq.s32.totalorder %s16, 1
      %p185 = por %p183, %p184
      %p186 = scmp.ne.s32.totalorder %s178, %s181
      %p187 = scmp.eq.s32.totalorder %s16, 0
      %p188 = por %p186, %p187
      %p189 = scmp.ne.s32.totalorder %s178, %s181
      %p190 = scmp.eq.s32.totalorder %s21, 1
      %p191 = por %p189, %p190
      %p192 = scmp.ne.s32.totalorder %s181, %s182
      %p193 = scmp.eq.s32.totalorder %s21, 0
      %p194 = por %p192, %p193
      %p195 = scmp.ne.s32.totalorder %s181, %s182
      %p196 = scmp.eq.s32.totalorder %s22, 1
      %p197 = por %p195, %p196
      %p199 = scmp.ne.s32.totalorder %s182, %s198
      %p200 = scmp.eq.s32.totalorder %s22, 0
      %p201 = por %p199, %p200
      %p202 = scmp.le.s32.totalorder 1, %s16
      %p203 = scmp.lt.s32.totalorder %s16, 3
      %p204 = pnand %p202, %p203
      %p205 = pneg %p204
      // Predicated region
      $region9: #{tpu_custom_call.1} parent=5 // pred_check
        _
      $region10: #{tpu_custom_call.1} parent=5 // pred_check_branch
        %207 = sbr.rel (%p204) target = $region12
      $region11: #{tpu_custom_call.1} parent=5 // pred_region
        %s208 = ssub.s32 %s16, 1
        // Predicated region
        $region13: #{tpu_custom_call.1} parent=11 // pred_check
          %p209 = pneg %p63
        $region14: #{tpu_custom_call.1} parent=11 // pred_check_branch
          %211 = sbr.rel (%p209) target = $region16
        $region15: #{tpu_custom_call.1} parent=11 // pred_region
          _
        $region16: #{tpu_custom_call.1} parent=11 // pred_fallthru
          _
        // Predicated region
        $region17: #{tpu_custom_call.1} parent=11 // pred_check
          %p212 = pneg %p84
        $region18: #{tpu_custom_call.1} parent=11 // pred_check_branch
          %214 = sbr.rel (%p212) target = $region20
        $region19: #{tpu_custom_call.1} parent=11 // pred_region
          _
        $region20: #{tpu_custom_call.1} parent=11 // pred_fallthru
          _
        // Predicated region
        $region21: #{tpu_custom_call.1} parent=11 // pred_check
          %p215 = pneg %p105
        $region22: #{tpu_custom_call.1} parent=11 // pred_check_branch
          %217 = sbr.rel (%p215) target = $region24
        $region23: #{tpu_custom_call.1} parent=11 // pred_region
          _
        $region24: #{tpu_custom_call.1} parent=11 // pred_fallthru
          _
        // Predicated region
        $region25: #{tpu_custom_call.1} parent=11 // pred_check
          %p218 = pneg %p126
        $region26: #{tpu_custom_call.1} parent=11 // pred_check_branch
          %220 = sbr.rel (%p218) target = $region28
        $region27: #{tpu_custom_call.1} parent=11 // pred_region
          _
        $region28: #{tpu_custom_call.1} parent=11 // pred_fallthru
          _
        // Predicated region
        $region29: #{tpu_custom_call.1} parent=11 // pred_check
          %p221 = pneg %p147
        $region30: #{tpu_custom_call.1} parent=11 // pred_check_branch
          %223 = sbr.rel (%p221) target = $region32
        $region31: #{tpu_custom_call.1} parent=11 // pred_region
          _
        $region32: #{tpu_custom_call.1} parent=11 // pred_fallthru
          _
        // Predicated region
        $region33: #{tpu_custom_call.1} parent=11 // pred_check
          %p224 = pneg %p168
        $region34: #{tpu_custom_call.1} parent=11 // pred_check_branch
          %226 = sbr.rel (%p224) target = $region36
        $region35: #{tpu_custom_call.1} parent=11 // pred_region
          _
        $region36: #{tpu_custom_call.1} parent=11 // pred_fallthru
          _
      $region12: #{tpu_custom_call.1} parent=5 // pred_fallthru
        _
      %p227 = scmp.lt.s32.totalorder %s16, 2
      // Predicated region
      $region37: #{tpu_custom_call.1} parent=5 // pred_check
        %p228 = pneg %p227
      $region38: #{tpu_custom_call.1} parent=5 // pred_check_branch
        %230 = sbr.rel (%p228) target = $region40
      $region39: #{tpu_custom_call.1} parent=5 // pred_region
        // Predicated region
        $region41: #{tpu_custom_call.1} parent=39 // pred_check
          %p231 = pneg %p36
        $region42: #{tpu_custom_call.1} parent=39 // pred_check_branch
          %233 = sbr.rel (%p231) target = $region44
        $region43: #{tpu_custom_call.1} parent=39 // pred_region
          %s234 = smul.u32 64, %s16
          %s235 = ssub.s32 125, %s234
          %p236 = scmp.lt.s32.totalorder %s235, 64
          %s237 = scalar_select %p236, %s235, 64
          %s238 = smul.u32 8, %s237
          %p239 = scmp.lt.s32.totalorder %s234, 124
          %s240 = scalar_select %p239, %s234, 124
          %s241 = smul.addr %s240, 8
          %s242 = scalar_lea.vmem %s0, %s241
          %s243 = smul.u32 64, %s16
          %s244 = ssub.s32 125, %s243
          %p245 = scmp.lt.s32.totalorder %s244, 64
          %s246 = scalar_select %p245, %s244, 64
          %s247 = smul.u32 8, %s246
        $region44: #{tpu_custom_call.1} parent=39 // pred_fallthru
          _
      $region40: #{tpu_custom_call.1} parent=5 // pred_fallthru
        _
      %p248 = scmp.le.s32.totalorder 1, %s16
      %p249 = scmp.lt.s32.totalorder %s16, 3
      %p250 = pnand %p248, %p249
      %p251 = pneg %p250
      // Predicated region
      $region45: #{tpu_custom_call.1} parent=5 // pred_check
        _
      $region46: #{tpu_custom_call.1} parent=5 // pred_check_branch
        %253 = sbr.rel (%p250) target = $region48
      $region47: #{tpu_custom_call.1} parent=5 // pred_region
        %s254 = ssub.s32 %s16, 1
        %s255 = smul.u32 64, %s21
        %s256 = ssub.s32 125, %s255
        %p257 = scmp.lt.s32.totalorder %s256, 64
        %s258 = scalar_select %p257, %s256, 64
        %s259 = smul.u32 8, %s258
        %p260 = scmp.lt.s32.totalorder %s255, 124
        %s261 = scalar_select %p260, %s255, 124
        %s262 = smul.addr %s261, 8
        %s263 = scalar_lea.vmem %s0, %s262
        %p264 = pneg %p42
        %p265 = pneg %p39
        %p266 = pneg %p63
        %p267 = pneg %p60
        %p268 = pneg %p84
        %p269 = pneg %p81
        %p270 = pneg %p105
        %p271 = pneg %p102
        %p272 = pneg %p126
        %p273 = pneg %p123
        %p274 = pneg %p147
        %p275 = pneg %p144
        %p276 = pneg %p168
        %p277 = pneg %p165
        %p278 = pneg %p194
        %p279 = pneg %p191
        %s280 = sand.u32 %s181, 1
        %s281 = scalar_lea.sflag [#allocation3], %s280
        %s282 = sand.u32 %s181, 1
        %s283 = smul.addr %s282, 256
        %s284 = scalar_lea.vmem [#allocation2], %s283
        %s285 = smul.u32 64, %s21
        %s286 = ssub.s32 125, %s285
        %p287 = scmp.lt.s32.totalorder %s286, 64
        %s288 = scalar_select %p287, %s286, 64
        %s289 = smul.u32 8, %s288
        %p290 = scmp.lt.s32.totalorder %s285, 124
        %s291 = scalar_select %p290, %s285, 124
        %s292 = smul.addr %s291, 8
        %s293 = scalar_lea.vmem %s0, %s292
        %s294 = smul.u32 64, %s21
        %s295 = ssub.s32 125, %s294
        %p296 = scmp.lt.s32.totalorder %s295, 64
        %s297 = scalar_select %p296, %s295, 64
        %s298 = smul.u32 8, %s297
        %s299 = smul.u32 64, %s21
        %s300 = ssub.s32 125, %s299
        %p301 = scmp.lt.s32.totalorder %s300, 64
        %s302 = scalar_select %p301, %s300, 64
        %s303 = smul.u32 4, %s302
        %v305 = vld [vmem:[%s293] sm:$0xff]
        %v306 = vld [vmem:[%s293 + $0x8] sm:$0xff]
        %v307 = vld [vmem:[%s293 + $0x10] sm:$0xff]
        %v308 = vld [vmem:[%s293 + $0x18] sm:$0xff]
        %v309 = vld [vmem:[%s293 + $0x20] sm:$0xff]
        %v310 = vld [vmem:[%s293 + $0x28] sm:$0xff]
        %v311 = vld [vmem:[%s293 + $0x30] sm:$0xff]
        %v312 = vld [vmem:[%s293 + $0x38] sm:$0xff]
        %v313 = vld [vmem:[%s293 + $0x40] sm:$0xff]
        %v314 = vld [vmem:[%s293 + $0x48] sm:$0xff]
        %v315 = vld [vmem:[%s293 + $0x50] sm:$0xff]
        %v316 = vld [vmem:[%s293 + $0x58] sm:$0xff]
        %v317 = vld [vmem:[%s293 + $0x60] sm:$0xff]
        %v318 = vld [vmem:[%s293 + $0x68] sm:$0xff]
        %v319 = vld [vmem:[%s293 + $0x70] sm:$0xff]
        %v320 = vld [vmem:[%s293 + $0x78] sm:$0xff]
        %v321 = vld [vmem:[%s293 + $0x80] sm:$0xff]
        %v322 = vld [vmem:[%s293 + $0x88] sm:$0xff]
        %v323 = vld [vmem:[%s293 + $0x90] sm:$0xff]
        %v324 = vld [vmem:[%s293 + $0x98] sm:$0xff]
        %v325 = vld [vmem:[%s293 + $0xa0] sm:$0xff]
        %v326 = vld [vmem:[%s293 + $0xa8] sm:$0xff]
        %v327 = vld [vmem:[%s293 + $0xb0] sm:$0xff]
        %v328 = vld [vmem:[%s293 + $0xb8] sm:$0xff]
        %v329 = vld [vmem:[%s293 + $0xc0] sm:$0xff]
        %v330 = vld [vmem:[%s293 + $0xc8] sm:$0xff]
        %v331 = vld [vmem:[%s293 + $0xd0] sm:$0xff]
        %v332 = vld [vmem:[%s293 + $0xd8] sm:$0xff]
        %v333 = vld [vmem:[%s293 + $0xe0] sm:$0xff]
        %v334 = vld [vmem:[%s293 + $0xe8] sm:$0xff]
        %v335 = vld [vmem:[%s293 + $0xf0] sm:$0xff]
        %v336 = vld [vmem:[%s293 + $0xf8] sm:$0xff]
        %v337 = vld [vmem:[%s293 + $0x100] sm:$0xff]
        %v338 = vld [vmem:[%s293 + $0x108] sm:$0xff]
        %v339 = vld [vmem:[%s293 + $0x110] sm:$0xff]
        %v340 = vld [vmem:[%s293 + $0x118] sm:$0xff]
        %v341 = vld [vmem:[%s293 + $0x120] sm:$0xff]
        %v342 = vld [vmem:[%s293 + $0x128] sm:$0xff]
        %v343 = vld [vmem:[%s293 + $0x130] sm:$0xff]
        %v344 = vld [vmem:[%s293 + $0x138] sm:$0xff]
        %v345 = vld [vmem:[%s293 + $0x140] sm:$0xff]
        %v346 = vld [vmem:[%s293 + $0x148] sm:$0xff]
        %v347 = vld [vmem:[%s293 + $0x150] sm:$0xff]
        %v348 = vld [vmem:[%s293 + $0x158] sm:$0xff]
        %v349 = vld [vmem:[%s293 + $0x160] sm:$0xff]
        %v350 = vld [vmem:[%s293 + $0x168] sm:$0xff]
        %v351 = vld [vmem:[%s293 + $0x170] sm:$0xff]
        %v352 = vld [vmem:[%s293 + $0x178] sm:$0xff]
        %v353 = vld [vmem:[%s293 + $0x180] sm:$0xff]
        %v354 = vld [vmem:[%s293 + $0x188] sm:$0xff]
        %v355 = vld [vmem:[%s293 + $0x190] sm:$0xff]
        %v356 = vld [vmem:[%s293 + $0x198] sm:$0xff]
        %v357 = vld [vmem:[%s293 + $0x1a0] sm:$0xff]
        %v358 = vld [vmem:[%s293 + $0x1a8] sm:$0xff]
        %v359 = vld [vmem:[%s293 + $0x1b0] sm:$0xff]
        %v360 = vld [vmem:[%s293 + $0x1b8] sm:$0xff]
        %v361 = vld [vmem:[%s293 + $0x1c0] sm:$0xff]
        %v362 = vld [vmem:[%s293 + $0x1c8] sm:$0xff]
        %v363 = vld [vmem:[%s293 + $0x1d0] sm:$0xff]
        %v364 = vld [vmem:[%s293 + $0x1d8] sm:$0xff]
        %v365 = vld [vmem:[%s293 + $0x1e0] sm:$0xff]
        %v366 = vld [vmem:[%s293 + $0x1e8] sm:$0xff]
        %v367 = vld [vmem:[%s293 + $0x1f0] sm:$0xff]
        %v368 = vld [vmem:[%s293 + $0x1f8] sm:$0xff]
        %v369 = vpack.c.bf16 %v306, %v305
        %v370 = vpack.c.bf16 %v308, %v307
        %v371 = vpack.c.bf16 %v310, %v309
        %v372 = vpack.c.bf16 %v312, %v311
        %v373 = vpack.c.bf16 %v314, %v313
        %v374 = vpack.c.bf16 %v316, %v315
        %v375 = vpack.c.bf16 %v318, %v317
        %v376 = vpack.c.bf16 %v320, %v319
        %v377 = vpack.c.bf16 %v322, %v321
        %v378 = vpack.c.bf16 %v324, %v323
        %v379 = vpack.c.bf16 %v326, %v325
        %v380 = vpack.c.bf16 %v328, %v327
        %v381 = vpack.c.bf16 %v330, %v329
        %v382 = vpack.c.bf16 %v332, %v331
        %v383 = vpack.c.bf16 %v334, %v333
        %v384 = vpack.c.bf16 %v336, %v335
        %v385 = vpack.c.bf16 %v338, %v337
        %v386 = vpack.c.bf16 %v340, %v339
        %v387 = vpack.c.bf16 %v342, %v341
        %v388 = vpack.c.bf16 %v344, %v343
        %v389 = vpack.c.bf16 %v346, %v345
        %v390 = vpack.c.bf16 %v348, %v347
        %v391 = vpack.c.bf16 %v350, %v349
        %v392 = vpack.c.bf16 %v352, %v351
        %v393 = vpack.c.bf16 %v354, %v353
        %v394 = vpack.c.bf16 %v356, %v355
        %v395 = vpack.c.bf16 %v358, %v357
        %v396 = vpack.c.bf16 %v360, %v359
        %v397 = vpack.c.bf16 %v362, %v361
        %v398 = vpack.c.bf16 %v364, %v363
        %v399 = vpack.c.bf16 %v366, %v365
        %v400 = vpack.c.bf16 %v368, %v367
        %v401 = vld [vmem:[%s1] sm:$0xf]
        %v402 = vld [vmem:[%s1 + $0x4] sm:$0xf]
        %v403 = vld [vmem:[%s1 + $0x8] sm:$0xf]
        %v404 = vld [vmem:[%s1 + $0xc] sm:$0xf]
        %v405 = vld [vmem:[%s2] sm:$0x1]
        %v407 = vperm.slane %v405, 0
        %v413 = vunpack.c.l.b16 %v401
        %v414 = vunpack.c.l.b16 %v402
        %v415 = vunpack.c.l.b16 %v403
        %v416 = vunpack.c.l.b16 %v404
        %v417 = vpack.c.b16 %v414, %v413
        %v418 = vpack.c.b16 %v416, %v415
        %vm421 = vcmask 261120
        %v423 = vsel %vm421, %v369, 0
        %v426 = vsel %vm421, %v370, 0
        %v429 = vsel %vm421, %v371, 0
        %v432 = vsel %vm421, %v372, 0
        %v435 = vsel %vm421, %v373, 0
        %v438 = vsel %vm421, %v374, 0
        %v441 = vsel %vm421, %v375, 0
        %v444 = vsel %vm421, %v376, 0
        %v447 = vsel %vm421, %v377, 0
        %v450 = vsel %vm421, %v378, 0
        %v453 = vsel %vm421, %v379, 0
        %v456 = vsel %vm421, %v380, 0
        %v459 = vsel %vm421, %v381, 0
        %v462 = vsel %vm421, %v382, 0
        %v465 = vsel %vm421, %v383, 0
        %v468 = vsel %vm421, %v384, 0
        %v471 = vsel %vm421, %v385, 0
        %v474 = vsel %vm421, %v386, 0
        %v477 = vsel %vm421, %v387, 0
        %v480 = vsel %vm421, %v388, 0
        %v483 = vsel %vm421, %v389, 0
        %v486 = vsel %vm421, %v390, 0
        %v489 = vsel %vm421, %v391, 0
        %v492 = vsel %vm421, %v392, 0
        %v495 = vsel %vm421, %v393, 0
        %v498 = vsel %vm421, %v394, 0
        %v501 = vsel %vm421, %v395, 0
        %v504 = vsel %vm421, %v396, 0
        %v507 = vsel %vm421, %v397, 0
        %v510 = vsel %vm421, %v398, 0
        %v513 = vsel %vm421, %v399, 0
        %v516 = vsel %vm421, %v400, 0
        %518 = vmatpush.bf16.msra.mxu0 0
        %519 = vmatpush.bf16.msra.mxu0 0
        %520 = vmatpush.bf16.msra.mxu0 0
        %521 = vmatpush.bf16.msra.mxu0 0
        %522 = vmatpush.bf16.msra.mxu0 0
        %523 = vmatpush.bf16.msra.mxu0 0
        %524 = vmatpush.bf16.msra.mxu0 %v418
        %525 = vmatpush.bf16.msra.mxu0 %v417
        %526 = vmatmul.bf16.gmra.mxu0 %v423
        %v527 = vpop.f32.mrf.mxu0
        %v528 = vadd.f32 %v407, %v527
        %v529 = vpop.f32.mrf.mxu0
        %v530 = vadd.f32 %v407, %v529
        %531 = vmatmul.bf16.gmra.mxu0 %v426
        %v532 = vpop.f32.mrf.mxu0
        %v533 = vadd.f32 %v407, %v532
        %v534 = vpop.f32.mrf.mxu0
        %v535 = vadd.f32 %v407, %v534
        %536 = vmatmul.bf16.gmra.mxu0 %v429
        %v537 = vpop.f32.mrf.mxu0
        %v538 = vadd.f32 %v407, %v537
        %v539 = vpop.f32.mrf.mxu0
        %v540 = vadd.f32 %v407, %v539
        %541 = vmatmul.bf16.gmra.mxu0 %v432
        %v542 = vpop.f32.mrf.mxu0
        %v543 = vadd.f32 %v407, %v542
        %v544 = vpop.f32.mrf.mxu0
        %v545 = vadd.f32 %v407, %v544
        %546 = vmatmul.bf16.gmra.mxu0 %v435
        %v547 = vpop.f32.mrf.mxu0
        %v548 = vadd.f32 %v407, %v547
        %v549 = vpop.f32.mrf.mxu0
        %v550 = vadd.f32 %v407, %v549
        %551 = vmatmul.bf16.gmra.mxu0 %v438
        %v552 = vpop.f32.mrf.mxu0
        %v553 = vadd.f32 %v407, %v552
        %v554 = vpop.f32.mrf.mxu0
        %v555 = vadd.f32 %v407, %v554
        %556 = vmatmul.bf16.gmra.mxu0 %v441
        %v557 = vpop.f32.mrf.mxu0
        %v558 = vadd.f32 %v407, %v557
        %v559 = vpop.f32.mrf.mxu0
        %v560 = vadd.f32 %v407, %v559
        %561 = vmatmul.bf16.gmra.mxu0 %v444
        %v562 = vpop.f32.mrf.mxu0
        %v563 = vadd.f32 %v407, %v562
        %v564 = vpop.f32.mrf.mxu0
        %v565 = vadd.f32 %v407, %v564
        %566 = vmatmul.bf16.gmra.mxu0 %v447
        %v567 = vpop.f32.mrf.mxu0
        %v568 = vadd.f32 %v407, %v567
        %v569 = vpop.f32.mrf.mxu0
        %v570 = vadd.f32 %v407, %v569
        %571 = vmatmul.bf16.gmra.mxu0 %v450
        %v572 = vpop.f32.mrf.mxu0
        %v573 = vadd.f32 %v407, %v572
        %v574 = vpop.f32.mrf.mxu0
        %v575 = vadd.f32 %v407, %v574
        %576 = vmatmul.bf16.gmra.mxu0 %v453
        %v577 = vpop.f32.mrf.mxu0
        %v578 = vadd.f32 %v407, %v577
        %v579 = vpop.f32.mrf.mxu0
        %v580 = vadd.f32 %v407, %v579
        %581 = vmatmul.bf16.gmra.mxu0 %v456
        %v582 = vpop.f32.mrf.mxu0
        %v583 = vadd.f32 %v407, %v582
        %v584 = vpop.f32.mrf.mxu0
        %v585 = vadd.f32 %v407, %v584
        %586 = vmatmul.bf16.gmra.mxu0 %v459
        %v587 = vpop.f32.mrf.mxu0
        %v588 = vadd.f32 %v407, %v587
        %v589 = vpop.f32.mrf.mxu0
        %v590 = vadd.f32 %v407, %v589
        %591 = vmatmul.bf16.gmra.mxu0 %v462
        %v592 = vpop.f32.mrf.mxu0
        %v593 = vadd.f32 %v407, %v592
        %v594 = vpop.f32.mrf.mxu0
        %v595 = vadd.f32 %v407, %v594
        %596 = vmatmul.bf16.gmra.mxu0 %v465
        %v597 = vpop.f32.mrf.mxu0
        %v598 = vadd.f32 %v407, %v597
        %v599 = vpop.f32.mrf.mxu0
        %v600 = vadd.f32 %v407, %v599
        %601 = vmatmul.bf16.gmra.mxu0 %v468
        %v602 = vpop.f32.mrf.mxu0
        %v603 = vadd.f32 %v407, %v602
        %v604 = vpop.f32.mrf.mxu0
        %v605 = vadd.f32 %v407, %v604
        %606 = vmatmul.bf16.gmra.mxu0 %v471
        %v607 = vpop.f32.mrf.mxu0
        %v608 = vadd.f32 %v407, %v607
        %v609 = vpop.f32.mrf.mxu0
        %v610 = vadd.f32 %v407, %v609
        %611 = vmatmul.bf16.gmra.mxu0 %v474
        %v612 = vpop.f32.mrf.mxu0
        %v613 = vadd.f32 %v407, %v612
        %v614 = vpop.f32.mrf.mxu0
        %v615 = vadd.f32 %v407, %v614
        %616 = vmatmul.bf16.gmra.mxu0 %v477
        %v617 = vpop.f32.mrf.mxu0
        %v618 = vadd.f32 %v407, %v617
        %v619 = vpop.f32.mrf.mxu0
        %v620 = vadd.f32 %v407, %v619
        %621 = vmatmul.bf16.gmra.mxu0 %v480
        %v622 = vpop.f32.mrf.mxu0
        %v623 = vadd.f32 %v407, %v622
        %v624 = vpop.f32.mrf.mxu0
        %v625 = vadd.f32 %v407, %v624
        %626 = vmatmul.bf16.gmra.mxu0 %v483
        %v627 = vpop.f32.mrf.mxu0
        %v628 = vadd.f32 %v407, %v627
        %v629 = vpop.f32.mrf.mxu0
        %v630 = vadd.f32 %v407, %v629
        %631 = vmatmul.bf16.gmra.mxu0 %v486
        %v632 = vpop.f32.mrf.mxu0
        %v633 = vadd.f32 %v407, %v632
        %v634 = vpop.f32.mrf.mxu0
        %v635 = vadd.f32 %v407, %v634
        %636 = vmatmul.bf16.gmra.mxu0 %v489
        %v637 = vpop.f32.mrf.mxu0
        %v638 = vadd.f32 %v407, %v637
        %v639 = vpop.f32.mrf.mxu0
        %v640 = vadd.f32 %v407, %v639
        %641 = vmatmul.bf16.gmra.mxu0 %v492
        %v642 = vpop.f32.mrf.mxu0
        %v643 = vadd.f32 %v407, %v642
        %v644 = vpop.f32.mrf.mxu0
        %v645 = vadd.f32 %v407, %v644
        %646 = vmatmul.bf16.gmra.mxu0 %v495
        %v647 = vpop.f32.mrf.mxu0
        %v648 = vadd.f32 %v407, %v647
        %v649 = vpop.f32.mrf.mxu0
        %v650 = vadd.f32 %v407, %v649
        %651 = vmatmul.bf16.gmra.mxu0 %v498
        %v652 = vpop.f32.mrf.mxu0
        %v653 = vadd.f32 %v407, %v652
        %v654 = vpop.f32.mrf.mxu0
        %v655 = vadd.f32 %v407, %v654
        %656 = vmatmul.bf16.gmra.mxu0 %v501
        %v657 = vpop.f32.mrf.mxu0
        %v658 = vadd.f32 %v407, %v657
        %v659 = vpop.f32.mrf.mxu0
        %v660 = vadd.f32 %v407, %v659
        %661 = vmatmul.bf16.gmra.mxu0 %v504
        %v662 = vpop.f32.mrf.mxu0
        %v663 = vadd.f32 %v407, %v662
        %v664 = vpop.f32.mrf.mxu0
        %v665 = vadd.f32 %v407, %v664
        %666 = vmatmul.bf16.gmra.mxu0 %v507
        %v667 = vpop.f32.mrf.mxu0
        %v668 = vadd.f32 %v407, %v667
        %v669 = vpop.f32.mrf.mxu0
        %v670 = vadd.f32 %v407, %v669
        %671 = vmatmul.bf16.gmra.mxu0 %v510
        %v672 = vpop.f32.mrf.mxu0
        %v673 = vadd.f32 %v407, %v672
        %v674 = vpop.f32.mrf.mxu0
        %v675 = vadd.f32 %v407, %v674
        %676 = vmatmul.bf16.gmra.mxu0 %v513
        %v677 = vpop.f32.mrf.mxu0
        %v678 = vadd.f32 %v407, %v677
        %v679 = vpop.f32.mrf.mxu0
        %v680 = vadd.f32 %v407, %v679
        %681 = vmatmul.bf16.gmra.mxu0 %v516
        %v682 = vpop.f32.mrf.mxu0
        %v683 = vadd.f32 %v407, %v682
        %v684 = vpop.f32.mrf.mxu0
        %v685 = vadd.f32 %v407, %v684
        %686 = vdwg.mxu0
        %v687 = vmax.f32 %v528, 0.0
        %v688 = vmax.f32 %v530, 0.0
        %v689 = vmax.f32 %v533, 0.0
        %v690 = vmax.f32 %v535, 0.0
        %v691 = vmax.f32 %v538, 0.0
        %v692 = vmax.f32 %v540, 0.0
        %v693 = vmax.f32 %v543, 0.0
        %v694 = vmax.f32 %v545, 0.0
        %v695 = vmax.f32 %v548, 0.0
        %v696 = vmax.f32 %v550, 0.0
        %v697 = vmax.f32 %v553, 0.0
        %v698 = vmax.f32 %v555, 0.0
        %v699 = vmax.f32 %v558, 0.0
        %v700 = vmax.f32 %v560, 0.0
        %v701 = vmax.f32 %v563, 0.0
        %v702 = vmax.f32 %v565, 0.0
        %v703 = vmax.f32 %v568, 0.0
        %v704 = vmax.f32 %v570, 0.0
        %v705 = vmax.f32 %v573, 0.0
        %v706 = vmax.f32 %v575, 0.0
        %v707 = vmax.f32 %v578, 0.0
        %v708 = vmax.f32 %v580, 0.0
        %v709 = vmax.f32 %v583, 0.0
        %v710 = vmax.f32 %v585, 0.0
        %v711 = vmax.f32 %v588, 0.0
        %v712 = vmax.f32 %v590, 0.0
        %v713 = vmax.f32 %v593, 0.0
        %v714 = vmax.f32 %v595, 0.0
        %v715 = vmax.f32 %v598, 0.0
        %v716 = vmax.f32 %v600, 0.0
        %v717 = vmax.f32 %v603, 0.0
        %v718 = vmax.f32 %v605, 0.0
        %v719 = vmax.f32 %v608, 0.0
        %v720 = vmax.f32 %v610, 0.0
        %v721 = vmax.f32 %v613, 0.0
        %v722 = vmax.f32 %v615, 0.0
        %v723 = vmax.f32 %v618, 0.0
        %v724 = vmax.f32 %v620, 0.0
        %v725 = vmax.f32 %v623, 0.0
        %v726 = vmax.f32 %v625, 0.0
        %v727 = vmax.f32 %v628, 0.0
        %v728 = vmax.f32 %v630, 0.0
        %v729 = vmax.f32 %v633, 0.0
        %v730 = vmax.f32 %v635, 0.0
        %v731 = vmax.f32 %v638, 0.0
        %v732 = vmax.f32 %v640, 0.0
        %v733 = vmax.f32 %v643, 0.0
        %v734 = vmax.f32 %v645, 0.0
        %v735 = vmax.f32 %v648, 0.0
        %v736 = vmax.f32 %v650, 0.0
        %v737 = vmax.f32 %v653, 0.0
        %v738 = vmax.f32 %v655, 0.0
        %v739 = vmax.f32 %v658, 0.0
        %v740 = vmax.f32 %v660, 0.0
        %v741 = vmax.f32 %v663, 0.0
        %v742 = vmax.f32 %v665, 0.0
        %v743 = vmax.f32 %v668, 0.0
        %v744 = vmax.f32 %v670, 0.0
        %v745 = vmax.f32 %v673, 0.0
        %v746 = vmax.f32 %v675, 0.0
        %v747 = vmax.f32 %v678, 0.0
        %v748 = vmax.f32 %v680, 0.0
        %v749 = vmax.f32 %v683, 0.0
        %v750 = vmax.f32 %v685, 0.0
        %v751 = vpack.c.bf16 %v688, %v687
        %v752 = vpack.c.bf16 %v690, %v689
        %v753 = vpack.c.bf16 %v692, %v691
        %v754 = vpack.c.bf16 %v694, %v693
        %v755 = vpack.c.bf16 %v696, %v695
        %v756 = vpack.c.bf16 %v698, %v697
        %v757 = vpack.c.bf16 %v700, %v699
        %v758 = vpack.c.bf16 %v702, %v701
        %v759 = vpack.c.bf16 %v704, %v703
        %v760 = vpack.c.bf16 %v706, %v705
        %v761 = vpack.c.bf16 %v708, %v707
        %v762 = vpack.c.bf16 %v710, %v709
        %v763 = vpack.c.bf16 %v712, %v711
        %v764 = vpack.c.bf16 %v714, %v713
        %v765 = vpack.c.bf16 %v716, %v715
        %v766 = vpack.c.bf16 %v718, %v717
        %v767 = vpack.c.bf16 %v720, %v719
        %v768 = vpack.c.bf16 %v722, %v721
        %v769 = vpack.c.bf16 %v724, %v723
        %v770 = vpack.c.bf16 %v726, %v725
        %v771 = vpack.c.bf16 %v728, %v727
        %v772 = vpack.c.bf16 %v730, %v729
        %v773 = vpack.c.bf16 %v732, %v731
        %v774 = vpack.c.bf16 %v734, %v733
        %v775 = vpack.c.bf16 %v736, %v735
        %v776 = vpack.c.bf16 %v738, %v737
        %v777 = vpack.c.bf16 %v740, %v739
        %v778 = vpack.c.bf16 %v742, %v741
        %v779 = vpack.c.bf16 %v744, %v743
        %v780 = vpack.c.bf16 %v746, %v745
        %v781 = vpack.c.bf16 %v748, %v747
        %v782 = vpack.c.bf16 %v750, %v749
        %v783 = vld [vmem:[%s3] sm:$0xf]
        %v784 = vld [vmem:[%s3 + $0x4] sm:$0xf]
        %v785 = vld [vmem:[%s3 + $0x8] sm:$0xf]
        %v786 = vld [vmem:[%s3 + $0xc] sm:$0xf]
        %v787 = vld [vmem:[%s3 + $0x10] sm:$0xf]
        %v788 = vld [vmem:[%s3 + $0x14] sm:$0xf]
        %v789 = vld [vmem:[%s3 + $0x18] sm:$0xf]
        %v790 = vld [vmem:[%s3 + $0x1c] sm:$0xf]
        %v791 = vld [vmem:[%s4] sm:$0x1]
        %v793 = vperm.slane %v791, 0
        %v803 = vunpack.c.l.b16 %v783
        %v804 = vunpack.c.l.b16 %v784
        %v805 = vunpack.c.l.b16 %v785
        %v806 = vunpack.c.l.b16 %v786
        %v807 = vunpack.c.l.b16 %v787
        %v808 = vunpack.c.l.b16 %v788
        %v809 = vunpack.c.l.b16 %v789
        %v810 = vunpack.c.l.b16 %v790
        %v811 = vpack.c.b16 %v804, %v803
        %v812 = vpack.c.b16 %v806, %v805
        %v813 = vpack.c.b16 %v808, %v807
        %v814 = vpack.c.b16 %v810, %v809
        %vm819 = vcmask 523264
        %v821 = vsel %vm819, %v751, 0
        %v824 = vsel %vm819, %v752, 0
        %v827 = vsel %vm819, %v753, 0
        %v830 = vsel %vm819, %v754, 0
        %v833 = vsel %vm819, %v755, 0
        %v836 = vsel %vm819, %v756, 0
        %v839 = vsel %vm819, %v757, 0
        %v842 = vsel %vm819, %v758, 0
        %v845 = vsel %vm819, %v759, 0
        %v848 = vsel %vm819, %v760, 0
        %v851 = vsel %vm819, %v761, 0
        %v854 = vsel %vm819, %v762, 0
        %v857 = vsel %vm819, %v763, 0
        %v860 = vsel %vm819, %v764, 0
        %v863 = vsel %vm819, %v765, 0
        %v866 = vsel %vm819, %v766, 0
        %v869 = vsel %vm819, %v767, 0
        %v872 = vsel %vm819, %v768, 0
        %v875 = vsel %vm819, %v769, 0
        %v878 = vsel %vm819, %v770, 0
        %v881 = vsel %vm819, %v771, 0
        %v884 = vsel %vm819, %v772, 0
        %v887 = vsel %vm819, %v773, 0
        %v890 = vsel %vm819, %v774, 0
        %v893 = vsel %vm819, %v775, 0
        %v896 = vsel %vm819, %v776, 0
        %v899 = vsel %vm819, %v777, 0
        %v902 = vsel %vm819, %v778, 0
        %v905 = vsel %vm819, %v779, 0
        %v908 = vsel %vm819, %v780, 0
        %v911 = vsel %vm819, %v781, 0
        %v914 = vsel %vm819, %v782, 0
        %916 = vmatpush.bf16.msra.mxu0 0
        %917 = vmatpush.bf16.msra.mxu0 0
        %918 = vmatpush.bf16.msra.mxu0 0
        %919 = vmatpush.bf16.msra.mxu0 0
        %920 = vmatpush.bf16.msra.mxu0 %v814
        %921 = vmatpush.bf16.msra.mxu0 %v813
        %922 = vmatpush.bf16.msra.mxu0 %v812
        %923 = vmatpush.bf16.msra.mxu0 %v811
        %924 = vmatmul.bf16.gmra.mxu0 %v821
        %v925 = vpop.f32.mrf.mxu0
        %v926 = vadd.f32 %v793, %v925
        %v927 = vpop.f32.mrf.mxu0
        %v928 = vadd.f32 %v793, %v927
        %929 = vmatmul.bf16.gmra.mxu0 %v824
        %v930 = vpop.f32.mrf.mxu0
        %v931 = vadd.f32 %v793, %v930
        %v932 = vpop.f32.mrf.mxu0
        %v933 = vadd.f32 %v793, %v932
        %934 = vmatmul.bf16.gmra.mxu0 %v827
        %v935 = vpop.f32.mrf.mxu0
        %v936 = vadd.f32 %v793, %v935
        %v937 = vpop.f32.mrf.mxu0
        %v938 = vadd.f32 %v793, %v937
        %939 = vmatmul.bf16.gmra.mxu0 %v830
        %v940 = vpop.f32.mrf.mxu0
        %v941 = vadd.f32 %v793, %v940
        %v942 = vpop.f32.mrf.mxu0
        %v943 = vadd.f32 %v793, %v942
        %944 = vmatmul.bf16.gmra.mxu0 %v833
        %v945 = vpop.f32.mrf.mxu0
        %v946 = vadd.f32 %v793, %v945
        %v947 = vpop.f32.mrf.mxu0
        %v948 = vadd.f32 %v793, %v947
        %949 = vmatmul.bf16.gmra.mxu0 %v836
        %v950 = vpop.f32.mrf.mxu0
        %v951 = vadd.f32 %v793, %v950
        %v952 = vpop.f32.mrf.mxu0
        %v953 = vadd.f32 %v793, %v952
        %954 = vmatmul.bf16.gmra.mxu0 %v839
        %v955 = vpop.f32.mrf.mxu0
        %v956 = vadd.f32 %v793, %v955
        %v957 = vpop.f32.mrf.mxu0
        %v958 = vadd.f32 %v793, %v957
        %959 = vmatmul.bf16.gmra.mxu0 %v842
        %v960 = vpop.f32.mrf.mxu0
        %v961 = vadd.f32 %v793, %v960
        %v962 = vpop.f32.mrf.mxu0
        %v963 = vadd.f32 %v793, %v962
        %964 = vmatmul.bf16.gmra.mxu0 %v845
        %v965 = vpop.f32.mrf.mxu0
        %v966 = vadd.f32 %v793, %v965
        %v967 = vpop.f32.mrf.mxu0
        %v968 = vadd.f32 %v793, %v967
        %969 = vmatmul.bf16.gmra.mxu0 %v848
        %v970 = vpop.f32.mrf.mxu0
        %v971 = vadd.f32 %v793, %v970
        %v972 = vpop.f32.mrf.mxu0
        %v973 = vadd.f32 %v793, %v972
        %974 = vmatmul.bf16.gmra.mxu0 %v851
        %v975 = vpop.f32.mrf.mxu0
        %v976 = vadd.f32 %v793, %v975
        %v977 = vpop.f32.mrf.mxu0
        %v978 = vadd.f32 %v793, %v977
        %979 = vmatmul.bf16.gmra.mxu0 %v854
        %v980 = vpop.f32.mrf.mxu0
        %v981 = vadd.f32 %v793, %v980
        %v982 = vpop.f32.mrf.mxu0
        %v983 = vadd.f32 %v793, %v982
        %984 = vmatmul.bf16.gmra.mxu0 %v857
        %v985 = vpop.f32.mrf.mxu0
        %v986 = vadd.f32 %v793, %v985
        %v987 = vpop.f32.mrf.mxu0
        %v988 = vadd.f32 %v793, %v987
        %989 = vmatmul.bf16.gmra.mxu0 %v860
        %v990 = vpop.f32.mrf.mxu0
        %v991 = vadd.f32 %v793, %v990
        %v992 = vpop.f32.mrf.mxu0
        %v993 = vadd.f32 %v793, %v992
        %994 = vmatmul.bf16.gmra.mxu0 %v863
        %v995 = vpop.f32.mrf.mxu0
        %v996 = vadd.f32 %v793, %v995
        %v997 = vpop.f32.mrf.mxu0
        %v998 = vadd.f32 %v793, %v997
        %999 = vmatmul.bf16.gmra.mxu0 %v866
        %v1000 = vpop.f32.mrf.mxu0
        %v1001 = vadd.f32 %v793, %v1000
        %v1002 = vpop.f32.mrf.mxu0
        %v1003 = vadd.f32 %v793, %v1002
        %1004 = vmatmul.bf16.gmra.mxu0 %v869
        %v1005 = vpop.f32.mrf.mxu0
        %v1006 = vadd.f32 %v793, %v1005
        %v1007 = vpop.f32.mrf.mxu0
        %v1008 = vadd.f32 %v793, %v1007
        %1009 = vmatmul.bf16.gmra.mxu0 %v872
        %v1010 = vpop.f32.mrf.mxu0
        %v1011 = vadd.f32 %v793, %v1010
        %v1012 = vpop.f32.mrf.mxu0
        %v1013 = vadd.f32 %v793, %v1012
        %1014 = vmatmul.bf16.gmra.mxu0 %v875
        %v1015 = vpop.f32.mrf.mxu0
        %v1016 = vadd.f32 %v793, %v1015
        %v1017 = vpop.f32.mrf.mxu0
        %v1018 = vadd.f32 %v793, %v1017
        %1019 = vmatmul.bf16.gmra.mxu0 %v878
        %v1020 = vpop.f32.mrf.mxu0
        %v1021 = vadd.f32 %v793, %v1020
        %v1022 = vpop.f32.mrf.mxu0
        %v1023 = vadd.f32 %v793, %v1022
        %1024 = vmatmul.bf16.gmra.mxu0 %v881
        %v1025 = vpop.f32.mrf.mxu0
        %v1026 = vadd.f32 %v793, %v1025
        %v1027 = vpop.f32.mrf.mxu0
        %v1028 = vadd.f32 %v793, %v1027
        %1029 = vmatmul.bf16.gmra.mxu0 %v884
        %v1030 = vpop.f32.mrf.mxu0
        %v1031 = vadd.f32 %v793, %v1030
        %v1032 = vpop.f32.mrf.mxu0
        %v1033 = vadd.f32 %v793, %v1032
        %1034 = vmatmul.bf16.gmra.mxu0 %v887
        %v1035 = vpop.f32.mrf.mxu0
        %v1036 = vadd.f32 %v793, %v1035
        %v1037 = vpop.f32.mrf.mxu0
        %v1038 = vadd.f32 %v793, %v1037
        %1039 = vmatmul.bf16.gmra.mxu0 %v890
        %v1040 = vpop.f32.mrf.mxu0
        %v1041 = vadd.f32 %v793, %v1040
        %v1042 = vpop.f32.mrf.mxu0
        %v1043 = vadd.f32 %v793, %v1042
        %1044 = vmatmul.bf16.gmra.mxu0 %v893
        %v1045 = vpop.f32.mrf.mxu0
        %v1046 = vadd.f32 %v793, %v1045
        %v1047 = vpop.f32.mrf.mxu0
        %v1048 = vadd.f32 %v793, %v1047
        %1049 = vmatmul.bf16.gmra.mxu0 %v896
        %v1050 = vpop.f32.mrf.mxu0
        %v1051 = vadd.f32 %v793, %v1050
        %v1052 = vpop.f32.mrf.mxu0
        %v1053 = vadd.f32 %v793, %v1052
        %1054 = vmatmul.bf16.gmra.mxu0 %v899
        %v1055 = vpop.f32.mrf.mxu0
        %v1056 = vadd.f32 %v793, %v1055
        %v1057 = vpop.f32.mrf.mxu0
        %v1058 = vadd.f32 %v793, %v1057
        %1059 = vmatmul.bf16.gmra.mxu0 %v902
        %v1060 = vpop.f32.mrf.mxu0
        %v1061 = vadd.f32 %v793, %v1060
        %v1062 = vpop.f32.mrf.mxu0
        %v1063 = vadd.f32 %v793, %v1062
        %1064 = vmatmul.bf16.gmra.mxu0 %v905
        %v1065 = vpop.f32.mrf.mxu0
        %v1066 = vadd.f32 %v793, %v1065
        %v1067 = vpop.f32.mrf.mxu0
        %v1068 = vadd.f32 %v793, %v1067
        %1069 = vmatmul.bf16.gmra.mxu0 %v908
        %v1070 = vpop.f32.mrf.mxu0
        %v1071 = vadd.f32 %v793, %v1070
        %v1072 = vpop.f32.mrf.mxu0
        %v1073 = vadd.f32 %v793, %v1072
        %1074 = vmatmul.bf16.gmra.mxu0 %v911
        %v1075 = vpop.f32.mrf.mxu0
        %v1076 = vadd.f32 %v793, %v1075
        %v1077 = vpop.f32.mrf.mxu0
        %v1078 = vadd.f32 %v793, %v1077
        %1079 = vmatmul.bf16.gmra.mxu0 %v914
        %v1080 = vpop.f32.mrf.mxu0
        %v1081 = vadd.f32 %v793, %v1080
        %v1082 = vpop.f32.mrf.mxu0
        %v1083 = vadd.f32 %v793, %v1082
        %1084 = vdwg.mxu0
        %v1085 = vmax.f32 %v926, 0.0
        %v1086 = vmax.f32 %v928, 0.0
        %v1087 = vmax.f32 %v931, 0.0
        %v1088 = vmax.f32 %v933, 0.0
        %v1089 = vmax.f32 %v936, 0.0
        %v1090 = vmax.f32 %v938, 0.0
        %v1091 = vmax.f32 %v941, 0.0
        %v1092 = vmax.f32 %v943, 0.0
        %v1093 = vmax.f32 %v946, 0.0
        %v1094 = vmax.f32 %v948, 0.0
        %v1095 = vmax.f32 %v951, 0.0
        %v1096 = vmax.f32 %v953, 0.0
        %v1097 = vmax.f32 %v956, 0.0
        %v1098 = vmax.f32 %v958, 0.0
        %v1099 = vmax.f32 %v961, 0.0
        %v1100 = vmax.f32 %v963, 0.0
        %v1101 = vmax.f32 %v966, 0.0
        %v1102 = vmax.f32 %v968, 0.0
        %v1103 = vmax.f32 %v971, 0.0
        %v1104 = vmax.f32 %v973, 0.0
        %v1105 = vmax.f32 %v976, 0.0
        %v1106 = vmax.f32 %v978, 0.0
        %v1107 = vmax.f32 %v981, 0.0
        %v1108 = vmax.f32 %v983, 0.0
        %v1109 = vmax.f32 %v986, 0.0
        %v1110 = vmax.f32 %v988, 0.0
        %v1111 = vmax.f32 %v991, 0.0
        %v1112 = vmax.f32 %v993, 0.0
        %v1113 = vmax.f32 %v996, 0.0
        %v1114 = vmax.f32 %v998, 0.0
        %v1115 = vmax.f32 %v1001, 0.0
        %v1116 = vmax.f32 %v1003, 0.0
        %v1117 = vmax.f32 %v1006, 0.0
        %v1118 = vmax.f32 %v1008, 0.0
        %v1119 = vmax.f32 %v1011, 0.0
        %v1120 = vmax.f32 %v1013, 0.0
        %v1121 = vmax.f32 %v1016, 0.0
        %v1122 = vmax.f32 %v1018, 0.0
        %v1123 = vmax.f32 %v1021, 0.0
        %v1124 = vmax.f32 %v1023, 0.0
        %v1125 = vmax.f32 %v1026, 0.0
        %v1126 = vmax.f32 %v1028, 0.0
        %v1127 = vmax.f32 %v1031, 0.0
        %v1128 = vmax.f32 %v1033, 0.0
        %v1129 = vmax.f32 %v1036, 0.0
        %v1130 = vmax.f32 %v1038, 0.0
        %v1131 = vmax.f32 %v1041, 0.0
        %v1132 = vmax.f32 %v1043, 0.0
        %v1133 = vmax.f32 %v1046, 0.0
        %v1134 = vmax.f32 %v1048, 0.0
        %v1135 = vmax.f32 %v1051, 0.0
        %v1136 = vmax.f32 %v1053, 0.0
        %v1137 = vmax.f32 %v1056, 0.0
        %v1138 = vmax.f32 %v1058, 0.0
        %v1139 = vmax.f32 %v1061, 0.0
        %v1140 = vmax.f32 %v1063, 0.0
        %v1141 = vmax.f32 %v1066, 0.0
        %v1142 = vmax.f32 %v1068, 0.0
        %v1143 = vmax.f32 %v1071, 0.0
        %v1144 = vmax.f32 %v1073, 0.0
        %v1145 = vmax.f32 %v1076, 0.0
        %v1146 = vmax.f32 %v1078, 0.0
        %v1147 = vmax.f32 %v1081, 0.0
        %v1148 = vmax.f32 %v1083, 0.0
        %v1149 = vpack.c.bf16 %v1086, %v1085
        %v1150 = vpack.c.bf16 %v1088, %v1087
        %v1151 = vpack.c.bf16 %v1090, %v1089
        %v1152 = vpack.c.bf16 %v1092, %v1091
        %v1153 = vpack.c.bf16 %v1094, %v1093
        %v1154 = vpack.c.bf16 %v1096, %v1095
        %v1155 = vpack.c.bf16 %v1098, %v1097
        %v1156 = vpack.c.bf16 %v1100, %v1099
        %v1157 = vpack.c.bf16 %v1102, %v1101
        %v1158 = vpack.c.bf16 %v1104, %v1103
        %v1159 = vpack.c.bf16 %v1106, %v1105
        %v1160 = vpack.c.bf16 %v1108, %v1107
        %v1161 = vpack.c.bf16 %v1110, %v1109
        %v1162 = vpack.c.bf16 %v1112, %v1111
        %v1163 = vpack.c.bf16 %v1114, %v1113
        %v1164 = vpack.c.bf16 %v1116, %v1115
        %v1165 = vpack.c.bf16 %v1118, %v1117
        %v1166 = vpack.c.bf16 %v1120, %v1119
        %v1167 = vpack.c.bf16 %v1122, %v1121
        %v1168 = vpack.c.bf16 %v1124, %v1123
        %v1169 = vpack.c.bf16 %v1126, %v1125
        %v1170 = vpack.c.bf16 %v1128, %v1127
        %v1171 = vpack.c.bf16 %v1130, %v1129
        %v1172 = vpack.c.bf16 %v1132, %v1131
        %v1173 = vpack.c.bf16 %v1134, %v1133
        %v1174 = vpack.c.bf16 %v1136, %v1135
        %v1175 = vpack.c.bf16 %v1138, %v1137
        %v1176 = vpack.c.bf16 %v1140, %v1139
        %v1177 = vpack.c.bf16 %v1142, %v1141
        %v1178 = vpack.c.bf16 %v1144, %v1143
        %v1179 = vpack.c.bf16 %v1146, %v1145
        %v1180 = vpack.c.bf16 %v1148, %v1147
        %v1181 = vld [vmem:[%s5] sm:$0xf]
        %v1182 = vld [vmem:[%s5 + $0x4] sm:$0xf]
        %v1183 = vld [vmem:[%s5 + $0x8] sm:$0xf]
        %v1184 = vld [vmem:[%s5 + $0xc] sm:$0xf]
        %v1185 = vld [vmem:[%s5 + $0x10] sm:$0xf]
        %v1186 = vld [vmem:[%s5 + $0x14] sm:$0xf]
        %v1187 = vld [vmem:[%s5 + $0x18] sm:$0xf]
        %v1188 = vld [vmem:[%s5 + $0x1c] sm:$0xf]
        %v1189 = vld [vmem:[%s6] sm:$0x1]
        %v1191 = vperm.slane %v1189, 0
        %v1201 = vunpack.c.l.b16 %v1181
        %v1202 = vunpack.c.l.b16 %v1182
        %v1203 = vunpack.c.l.b16 %v1183
        %v1204 = vunpack.c.l.b16 %v1184
        %v1205 = vunpack.c.l.b16 %v1185
        %v1206 = vunpack.c.l.b16 %v1186
        %v1207 = vunpack.c.l.b16 %v1187
        %v1208 = vunpack.c.l.b16 %v1188
        %v1209 = vpack.c.b16 %v1202, %v1201
        %v1210 = vpack.c.b16 %v1204, %v1203
        %v1211 = vpack.c.b16 %v1206, %v1205
        %v1212 = vpack.c.b16 %v1208, %v1207
        %v1218 = vsel %vm819, %v1149, 0
        %v1221 = vsel %vm819, %v1150, 0
        %v1224 = vsel %vm819, %v1151, 0
        %v1227 = vsel %vm819, %v1152, 0
        %v1230 = vsel %vm819, %v1153, 0
        %v1233 = vsel %vm819, %v1154, 0
        %v1236 = vsel %vm819, %v1155, 0
        %v1239 = vsel %vm819, %v1156, 0
        %v1242 = vsel %vm819, %v1157, 0
        %v1245 = vsel %vm819, %v1158, 0
        %v1248 = vsel %vm819, %v1159, 0
        %v1251 = vsel %vm819, %v1160, 0
        %v1254 = vsel %vm819, %v1161, 0
        %v1257 = vsel %vm819, %v1162, 0
        %v1260 = vsel %vm819, %v1163, 0
        %v1263 = vsel %vm819, %v1164, 0
        %v1266 = vsel %vm819, %v1165, 0
        %v1269 = vsel %vm819, %v1166, 0
        %v1272 = vsel %vm819, %v1167, 0
        %v1275 = vsel %vm819, %v1168, 0
        %v1278 = vsel %vm819, %v1169, 0
        %v1281 = vsel %vm819, %v1170, 0
        %v1284 = vsel %vm819, %v1171, 0
        %v1287 = vsel %vm819, %v1172, 0
        %v1290 = vsel %vm819, %v1173, 0
        %v1293 = vsel %vm819, %v1174, 0
        %v1296 = vsel %vm819, %v1175, 0
        %v1299 = vsel %vm819, %v1176, 0
        %v1302 = vsel %vm819, %v1177, 0
        %v1305 = vsel %vm819, %v1178, 0
        %v1308 = vsel %vm819, %v1179, 0
        %v1311 = vsel %vm819, %v1180, 0
        %1313 = vmatpush.bf16.msra.mxu0 0
        %1314 = vmatpush.bf16.msra.mxu0 0
        %1315 = vmatpush.bf16.msra.mxu0 0
        %1316 = vmatpush.bf16.msra.mxu0 0
        %1317 = vmatpush.bf16.msra.mxu0 %v1212
        %1318 = vmatpush.bf16.msra.mxu0 %v1211
        %1319 = vmatpush.bf16.msra.mxu0 %v1210
        %1320 = vmatpush.bf16.msra.mxu0 %v1209
        %1321 = vmatmul.bf16.gmra.mxu0 %v1218
        %v1322 = vpop.f32.mrf.mxu0
        %v1323 = vadd.f32 %v1191, %v1322
        %v1324 = vpop.f32.mrf.mxu0
        %v1325 = vadd.f32 %v1191, %v1324
        %1326 = vmatmul.bf16.gmra.mxu0 %v1221
        %v1327 = vpop.f32.mrf.mxu0
        %v1328 = vadd.f32 %v1191, %v1327
        %v1329 = vpop.f32.mrf.mxu0
        %v1330 = vadd.f32 %v1191, %v1329
        %1331 = vmatmul.bf16.gmra.mxu0 %v1224
        %v1332 = vpop.f32.mrf.mxu0
        %v1333 = vadd.f32 %v1191, %v1332
        %v1334 = vpop.f32.mrf.mxu0
        %v1335 = vadd.f32 %v1191, %v1334
        %1336 = vmatmul.bf16.gmra.mxu0 %v1227
        %v1337 = vpop.f32.mrf.mxu0
        %v1338 = vadd.f32 %v1191, %v1337
        %v1339 = vpop.f32.mrf.mxu0
        %v1340 = vadd.f32 %v1191, %v1339
        %1341 = vmatmul.bf16.gmra.mxu0 %v1230
        %v1342 = vpop.f32.mrf.mxu0
        %v1343 = vadd.f32 %v1191, %v1342
        %v1344 = vpop.f32.mrf.mxu0
        %v1345 = vadd.f32 %v1191, %v1344
        %1346 = vmatmul.bf16.gmra.mxu0 %v1233
        %v1347 = vpop.f32.mrf.mxu0
        %v1348 = vadd.f32 %v1191, %v1347
        %v1349 = vpop.f32.mrf.mxu0
        %v1350 = vadd.f32 %v1191, %v1349
        %1351 = vmatmul.bf16.gmra.mxu0 %v1236
        %v1352 = vpop.f32.mrf.mxu0
        %v1353 = vadd.f32 %v1191, %v1352
        %v1354 = vpop.f32.mrf.mxu0
        %v1355 = vadd.f32 %v1191, %v1354
        %1356 = vmatmul.bf16.gmra.mxu0 %v1239
        %v1357 = vpop.f32.mrf.mxu0
        %v1358 = vadd.f32 %v1191, %v1357
        %v1359 = vpop.f32.mrf.mxu0
        %v1360 = vadd.f32 %v1191, %v1359
        %1361 = vmatmul.bf16.gmra.mxu0 %v1242
        %v1362 = vpop.f32.mrf.mxu0
        %v1363 = vadd.f32 %v1191, %v1362
        %v1364 = vpop.f32.mrf.mxu0
        %v1365 = vadd.f32 %v1191, %v1364
        %1366 = vmatmul.bf16.gmra.mxu0 %v1245
        %v1367 = vpop.f32.mrf.mxu0
        %v1368 = vadd.f32 %v1191, %v1367
        %v1369 = vpop.f32.mrf.mxu0
        %v1370 = vadd.f32 %v1191, %v1369
        %1371 = vmatmul.bf16.gmra.mxu0 %v1248
        %v1372 = vpop.f32.mrf.mxu0
        %v1373 = vadd.f32 %v1191, %v1372
        %v1374 = vpop.f32.mrf.mxu0
        %v1375 = vadd.f32 %v1191, %v1374
        %1376 = vmatmul.bf16.gmra.mxu0 %v1251
        %v1377 = vpop.f32.mrf.mxu0
        %v1378 = vadd.f32 %v1191, %v1377
        %v1379 = vpop.f32.mrf.mxu0
        %v1380 = vadd.f32 %v1191, %v1379
        %1381 = vmatmul.bf16.gmra.mxu0 %v1254
        %v1382 = vpop.f32.mrf.mxu0
        %v1383 = vadd.f32 %v1191, %v1382
        %v1384 = vpop.f32.mrf.mxu0
        %v1385 = vadd.f32 %v1191, %v1384
        %1386 = vmatmul.bf16.gmra.mxu0 %v1257
        %v1387 = vpop.f32.mrf.mxu0
        %v1388 = vadd.f32 %v1191, %v1387
        %v1389 = vpop.f32.mrf.mxu0
        %v1390 = vadd.f32 %v1191, %v1389
        %1391 = vmatmul.bf16.gmra.mxu0 %v1260
        %v1392 = vpop.f32.mrf.mxu0
        %v1393 = vadd.f32 %v1191, %v1392
        %v1394 = vpop.f32.mrf.mxu0
        %v1395 = vadd.f32 %v1191, %v1394
        %1396 = vmatmul.bf16.gmra.mxu0 %v1263
        %v1397 = vpop.f32.mrf.mxu0
        %v1398 = vadd.f32 %v1191, %v1397
        %v1399 = vpop.f32.mrf.mxu0
        %v1400 = vadd.f32 %v1191, %v1399
        %1401 = vmatmul.bf16.gmra.mxu0 %v1266
        %v1402 = vpop.f32.mrf.mxu0
        %v1403 = vadd.f32 %v1191, %v1402
        %v1404 = vpop.f32.mrf.mxu0
        %v1405 = vadd.f32 %v1191, %v1404
        %1406 = vmatmul.bf16.gmra.mxu0 %v1269
        %v1407 = vpop.f32.mrf.mxu0
        %v1408 = vadd.f32 %v1191, %v1407
        %v1409 = vpop.f32.mrf.mxu0
        %v1410 = vadd.f32 %v1191, %v1409
        %1411 = vmatmul.bf16.gmra.mxu0 %v1272
        %v1412 = vpop.f32.mrf.mxu0
        %v1413 = vadd.f32 %v1191, %v1412
        %v1414 = vpop.f32.mrf.mxu0
        %v1415 = vadd.f32 %v1191, %v1414
        %1416 = vmatmul.bf16.gmra.mxu0 %v1275
        %v1417 = vpop.f32.mrf.mxu0
        %v1418 = vadd.f32 %v1191, %v1417
        %v1419 = vpop.f32.mrf.mxu0
        %v1420 = vadd.f32 %v1191, %v1419
        %1421 = vmatmul.bf16.gmra.mxu0 %v1278
        %v1422 = vpop.f32.mrf.mxu0
        %v1423 = vadd.f32 %v1191, %v1422
        %v1424 = vpop.f32.mrf.mxu0
        %v1425 = vadd.f32 %v1191, %v1424
        %1426 = vmatmul.bf16.gmra.mxu0 %v1281
        %v1427 = vpop.f32.mrf.mxu0
        %v1428 = vadd.f32 %v1191, %v1427
        %v1429 = vpop.f32.mrf.mxu0
        %v1430 = vadd.f32 %v1191, %v1429
        %1431 = vmatmul.bf16.gmra.mxu0 %v1284
        %v1432 = vpop.f32.mrf.mxu0
        %v1433 = vadd.f32 %v1191, %v1432
        %v1434 = vpop.f32.mrf.mxu0
        %v1435 = vadd.f32 %v1191, %v1434
        %1436 = vmatmul.bf16.gmra.mxu0 %v1287
        %v1437 = vpop.f32.mrf.mxu0
        %v1438 = vadd.f32 %v1191, %v1437
        %v1439 = vpop.f32.mrf.mxu0
        %v1440 = vadd.f32 %v1191, %v1439
        %1441 = vmatmul.bf16.gmra.mxu0 %v1290
        %v1442 = vpop.f32.mrf.mxu0
        %v1443 = vadd.f32 %v1191, %v1442
        %v1444 = vpop.f32.mrf.mxu0
        %v1445 = vadd.f32 %v1191, %v1444
        %1446 = vmatmul.bf16.gmra.mxu0 %v1293
        %v1447 = vpop.f32.mrf.mxu0
        %v1448 = vadd.f32 %v1191, %v1447
        %v1449 = vpop.f32.mrf.mxu0
        %v1450 = vadd.f32 %v1191, %v1449
        %1451 = vmatmul.bf16.gmra.mxu0 %v1296
        %v1452 = vpop.f32.mrf.mxu0
        %v1453 = vadd.f32 %v1191, %v1452
        %v1454 = vpop.f32.mrf.mxu0
        %v1455 = vadd.f32 %v1191, %v1454
        %1456 = vmatmul.bf16.gmra.mxu0 %v1299
        %v1457 = vpop.f32.mrf.mxu0
        %v1458 = vadd.f32 %v1191, %v1457
        %v1459 = vpop.f32.mrf.mxu0
        %v1460 = vadd.f32 %v1191, %v1459
        %1461 = vmatmul.bf16.gmra.mxu0 %v1302
        %v1462 = vpop.f32.mrf.mxu0
        %v1463 = vadd.f32 %v1191, %v1462
        %v1464 = vpop.f32.mrf.mxu0
        %v1465 = vadd.f32 %v1191, %v1464
        %1466 = vmatmul.bf16.gmra.mxu0 %v1305
        %v1467 = vpop.f32.mrf.mxu0
        %v1468 = vadd.f32 %v1191, %v1467
        %v1469 = vpop.f32.mrf.mxu0
        %v1470 = vadd.f32 %v1191, %v1469
        %1471 = vmatmul.bf16.gmra.mxu0 %v1308
        %v1472 = vpop.f32.mrf.mxu0
        %v1473 = vadd.f32 %v1191, %v1472
        %v1474 = vpop.f32.mrf.mxu0
        %v1475 = vadd.f32 %v1191, %v1474
        %1476 = vmatmul.bf16.gmra.mxu0 %v1311
        %v1477 = vpop.f32.mrf.mxu0
        %v1478 = vadd.f32 %v1191, %v1477
        %v1479 = vpop.f32.mrf.mxu0
        %v1480 = vadd.f32 %v1191, %v1479
        %1481 = vdwg.mxu0
        %v1482 = vpack.c.bf16 %v1323, %v1323
        %v1483 = vpack.c.bf16 %v1325, %v1325
        %v1484 = vpack.c.bf16 %v1328, %v1328
        %v1485 = vpack.c.bf16 %v1330, %v1330
        %v1486 = vpack.c.bf16 %v1333, %v1333
        %v1487 = vpack.c.bf16 %v1335, %v1335
        %v1488 = vpack.c.bf16 %v1338, %v1338
        %v1489 = vpack.c.bf16 %v1340, %v1340
        %v1490 = vpack.c.bf16 %v1343, %v1343
        %v1491 = vpack.c.bf16 %v1345, %v1345
        %v1492 = vpack.c.bf16 %v1348, %v1348
        %v1493 = vpack.c.bf16 %v1350, %v1350
        %v1494 = vpack.c.bf16 %v1353, %v1353
        %v1495 = vpack.c.bf16 %v1355, %v1355
        %v1496 = vpack.c.bf16 %v1358, %v1358
        %v1497 = vpack.c.bf16 %v1360, %v1360
        %v1498 = vpack.c.bf16 %v1363, %v1363
        %v1499 = vpack.c.bf16 %v1365, %v1365
        %v1500 = vpack.c.bf16 %v1368, %v1368
        %v1501 = vpack.c.bf16 %v1370, %v1370
        %v1502 = vpack.c.bf16 %v1373, %v1373
        %v1503 = vpack.c.bf16 %v1375, %v1375
        %v1504 = vpack.c.bf16 %v1378, %v1378
        %v1505 = vpack.c.bf16 %v1380, %v1380
        %v1506 = vpack.c.bf16 %v1383, %v1383
        %v1507 = vpack.c.bf16 %v1385, %v1385
        %v1508 = vpack.c.bf16 %v1388, %v1388
        %v1509 = vpack.c.bf16 %v1390, %v1390
        %v1510 = vpack.c.bf16 %v1393, %v1393
        %v1511 = vpack.c.bf16 %v1395, %v1395
        %v1512 = vpack.c.bf16 %v1398, %v1398
        %v1513 = vpack.c.bf16 %v1400, %v1400
        %v1514 = vpack.c.bf16 %v1403, %v1403
        %v1515 = vpack.c.bf16 %v1405, %v1405
        %v1516 = vpack.c.bf16 %v1408, %v1408
        %v1517 = vpack.c.bf16 %v1410, %v1410
        %v1518 = vpack.c.bf16 %v1413, %v1413
        %v1519 = vpack.c.bf16 %v1415, %v1415
        %v1520 = vpack.c.bf16 %v1418, %v1418
        %v1521 = vpack.c.bf16 %v1420, %v1420
        %v1522 = vpack.c.bf16 %v1423, %v1423
        %v1523 = vpack.c.bf16 %v1425, %v1425
        %v1524 = vpack.c.bf16 %v1428, %v1428
        %v1525 = vpack.c.bf16 %v1430, %v1430
        %v1526 = vpack.c.bf16 %v1433, %v1433
        %v1527 = vpack.c.bf16 %v1435, %v1435
        %v1528 = vpack.c.bf16 %v1438, %v1438
        %v1529 = vpack.c.bf16 %v1440, %v1440
        %v1530 = vpack.c.bf16 %v1443, %v1443
        %v1531 = vpack.c.bf16 %v1445, %v1445
        %v1532 = vpack.c.bf16 %v1448, %v1448
        %v1533 = vpack.c.bf16 %v1450, %v1450
        %v1534 = vpack.c.bf16 %v1453, %v1453
        %v1535 = vpack.c.bf16 %v1455, %v1455
        %v1536 = vpack.c.bf16 %v1458, %v1458
        %v1537 = vpack.c.bf16 %v1460, %v1460
        %v1538 = vpack.c.bf16 %v1463, %v1463
        %v1539 = vpack.c.bf16 %v1465, %v1465
        %v1540 = vpack.c.bf16 %v1468, %v1468
        %v1541 = vpack.c.bf16 %v1470, %v1470
        %v1542 = vpack.c.bf16 %v1473, %v1473
        %v1543 = vpack.c.bf16 %v1475, %v1475
        %v1544 = vpack.c.bf16 %v1478, %v1478
        %v1545 = vpack.c.bf16 %v1480, %v1480
        %1546 = vst [vmem:[%s284] sm:$0xf] %v1482
        %1547 = vst [vmem:[%s284 + $0x4] sm:$0xf] %v1483
        %1548 = vst [vmem:[%s284 + $0x8] sm:$0xf] %v1484
        %1549 = vst [vmem:[%s284 + $0xc] sm:$0xf] %v1485
        %1550 = vst [vmem:[%s284 + $0x10] sm:$0xf] %v1486
        %1551 = vst [vmem:[%s284 + $0x14] sm:$0xf] %v1487
        %1552 = vst [vmem:[%s284 + $0x18] sm:$0xf] %v1488
        %1553 = vst [vmem:[%s284 + $0x1c] sm:$0xf] %v1489
        %1554 = vst [vmem:[%s284 + $0x20] sm:$0xf] %v1490
        %1555 = vst [vmem:[%s284 + $0x24] sm:$0xf] %v1491
        %1556 = vst [vmem:[%s284 + $0x28] sm:$0xf] %v1492
        %1557 = vst [vmem:[%s284 + $0x2c] sm:$0xf] %v1493
        %1558 = vst [vmem:[%s284 + $0x30] sm:$0xf] %v1494
        %1559 = vst [vmem:[%s284 + $0x34] sm:$0xf] %v1495
        %1560 = vst [vmem:[%s284 + $0x38] sm:$0xf] %v1496
        %1561 = vst [vmem:[%s284 + $0x3c] sm:$0xf] %v1497
        %1562 = vst [vmem:[%s284 + $0x40] sm:$0xf] %v1498
        %1563 = vst [vmem:[%s284 + $0x44] sm:$0xf] %v1499
        %1564 = vst [vmem:[%s284 + $0x48] sm:$0xf] %v1500
        %1565 = vst [vmem:[%s284 + $0x4c] sm:$0xf] %v1501
        %1566 = vst [vmem:[%s284 + $0x50] sm:$0xf] %v1502
        %1567 = vst [vmem:[%s284 + $0x54] sm:$0xf] %v1503
        %1568 = vst [vmem:[%s284 + $0x58] sm:$0xf] %v1504
        %1569 = vst [vmem:[%s284 + $0x5c] sm:$0xf] %v1505
        %1570 = vst [vmem:[%s284 + $0x60] sm:$0xf] %v1506
        %1571 = vst [vmem:[%s284 + $0x64] sm:$0xf] %v1507
        %1572 = vst [vmem:[%s284 + $0x68] sm:$0xf] %v1508
        %1573 = vst [vmem:[%s284 + $0x6c] sm:$0xf] %v1509
        %1574 = vst [vmem:[%s284 + $0x70] sm:$0xf] %v1510
        %1575 = vst [vmem:[%s284 + $0x74] sm:$0xf] %v1511
        %1576 = vst [vmem:[%s284 + $0x78] sm:$0xf] %v1512
        %1577 = vst [vmem:[%s284 + $0x7c] sm:$0xf] %v1513
        %1578 = vst [vmem:[%s284 + $0x80] sm:$0xf] %v1514
        %1579 = vst [vmem:[%s284 + $0x84] sm:$0xf] %v1515
        %1580 = vst [vmem:[%s284 + $0x88] sm:$0xf] %v1516
        %1581 = vst [vmem:[%s284 + $0x8c] sm:$0xf] %v1517
        %1582 = vst [vmem:[%s284 + $0x90] sm:$0xf] %v1518
        %1583 = vst [vmem:[%s284 + $0x94] sm:$0xf] %v1519
        %1584 = vst [vmem:[%s284 + $0x98] sm:$0xf] %v1520
        %1585 = vst [vmem:[%s284 + $0x9c] sm:$0xf] %v1521
        %1586 = vst [vmem:[%s284 + $0xa0] sm:$0xf] %v1522
        %1587 = vst [vmem:[%s284 + $0xa4] sm:$0xf] %v1523
        %1588 = vst [vmem:[%s284 + $0xa8] sm:$0xf] %v1524
        %1589 = vst [vmem:[%s284 + $0xac] sm:$0xf] %v1525
        %1590 = vst [vmem:[%s284 + $0xb0] sm:$0xf] %v1526
        %1591 = vst [vmem:[%s284 + $0xb4] sm:$0xf] %v1527
        %1592 = vst [vmem:[%s284 + $0xb8] sm:$0xf] %v1528
        %1593 = vst [vmem:[%s284 + $0xbc] sm:$0xf] %v1529
        %1594 = vst [vmem:[%s284 + $0xc0] sm:$0xf] %v1530
        %1595 = vst [vmem:[%s284 + $0xc4] sm:$0xf] %v1531
        %1596 = vst [vmem:[%s284 + $0xc8] sm:$0xf] %v1532
        %1597 = vst [vmem:[%s284 + $0xcc] sm:$0xf] %v1533
        %1598 = vst [vmem:[%s284 + $0xd0] sm:$0xf] %v1534
        %1599 = vst [vmem:[%s284 + $0xd4] sm:$0xf] %v1535
        %1600 = vst [vmem:[%s284 + $0xd8] sm:$0xf] %v1536
        %1601 = vst [vmem:[%s284 + $0xdc] sm:$0xf] %v1537
        %1602 = vst [vmem:[%s284 + $0xe0] sm:$0xf] %v1538
        %1603 = vst [vmem:[%s284 + $0xe4] sm:$0xf] %v1539
        %1604 = vst [vmem:[%s284 + $0xe8] sm:$0xf] %v1540
        %1605 = vst [vmem:[%s284 + $0xec] sm:$0xf] %v1541
        %1606 = vst [vmem:[%s284 + $0xf0] sm:$0xf] %v1542
        %1607 = vst [vmem:[%s284 + $0xf4] sm:$0xf] %v1543
        %1608 = vst [vmem:[%s284 + $0xf8] sm:$0xf] %v1544
        %1609 = vst [vmem:[%s284 + $0xfc] sm:$0xf] %v1545
        %s1610 = sand.u32 %s181, 1
        %s1611 = scalar_lea.sflag [#allocation3], %s1610
        %s1612 = sand.u32 %s181, 1
        %s1613 = smul.addr %s1612, 256
        %s1614 = scalar_lea.vmem [#allocation2], %s1613
        // Predicated region
        $region49: #{tpu_custom_call.1} parent=47 // pred_check
          %p1615 = pneg %p191
        $region50: #{tpu_custom_call.1} parent=47 // pred_check_branch
          %1617 = sbr.rel (%p1615) target = $region52
        $region51: #{tpu_custom_call.1} parent=47 // pred_region
          %s1618 = smul.u32 64, %s21
          %s1619 = ssub.s32 125, %s1618
          %p1620 = scmp.lt.s32.totalorder %s1619, 64
          %s1621 = scalar_select %p1620, %s1619, 64
          %s1622 = smul.u32 4, %s1621
          %s1623 = ssub.s32 256, %s1622
          %s1624 = sshll.u32 %s1623, 4
          %1625 = vsyncadd %s1611, %s1624
          %p1626 = scmp.ne.s32.totalorder 0, %s1622
          %s1627 = smul.addr %s1618, 4
          %s1628 = scalar_lea.hbm %s7, %s1627
          %s1629 = smul.u32 4, %s1621
          %s1630 = sshll.u32 %s1614, 4
          %s1631 = int_to_ptr.vmem [resolvable:$true] %s1630
          %s1632 = sshll.u32 %s1628, 4
          %s1633 = int_to_ptr.hbm [resolvable:$true] %s1632
          %s1634 = sshll.u32 %s1629, 4
          %1638 = dma.vmem_to_hbm [thread:$0]  (%p1626), %s1631, %s1634, %s1633, %s1611, 64, 64, 4
        $region52: #{tpu_custom_call.1} parent=47 // pred_fallthru
          _
      $region48: #{tpu_custom_call.1} parent=5 // pred_fallthru
        _
      %p1639 = scmp.le.s32.totalorder 2, %s16
      // Predicated region
      $region53: #{tpu_custom_call.1} parent=5 // pred_check
        %p1640 = pneg %p1639
      $region54: #{tpu_custom_call.1} parent=5 // pred_check_branch
        %1642 = sbr.rel (%p1640) target = $region56
      $region55: #{tpu_custom_call.1} parent=5 // pred_region
        %s1643 = ssub.s32 %s16, 2
        // Predicated region
        $region57: #{tpu_custom_call.1} parent=55 // pred_check
          %p1644 = pneg %p197
        $region58: #{tpu_custom_call.1} parent=55 // pred_check_branch
          %1646 = sbr.rel (%p1644) target = $region60
        $region59: #{tpu_custom_call.1} parent=55 // pred_region
          %s1647 = sand.u32 %s182, 1
          %s1648 = scalar_lea.sflag [#allocation3], %s1647
          %s1649 = sand.u32 %s182, 1
          %s1650 = smul.addr %s1649, 256
          %s1651 = scalar_lea.vmem [#allocation2], %s1650
          %1653 = dma.done %s1648, 4096
        $region60: #{tpu_custom_call.1} parent=55 // pred_fallthru
          _
      $region56: #{tpu_custom_call.1} parent=5 // pred_fallthru
        _
    $region6: #{tpu_custom_call.1} parent=1 // loop_footer
      %s20 = sadd.s32 1, %s16
    $region7: #{tpu_custom_call.1} parent=1 // loop_footer_branch
      %15 = sbr.rel target = $region3
    $region8: #{tpu_custom_call.1} parent=1 // loop_exit
      _
    %1654 = vsyncpa [#allocation3], 1
    %s1655 = scalar_lea.sflag [#allocation3], 1
    %1656 = vsyncpa %s1655, 1

</llo_original>
